<compile_context>
chip_gen: v7x
topology: tpu7x:2x2x1
jax: 0.10.0
libtpu: 0.0.40
codegen_flags: <defaults>
</compile_context>

<pallas_src>
import functools

import jax
import jax.numpy as jnp
from jax.experimental import pallas as pl
from jax.experimental.pallas import tpu as pltpu


def fnn_lm_kernel(T, nv,
                  ids_ref, emb_ref, w_ref, b_ref, out_ref,
                  vc_ref, m_ref, l_ref):
    """Grid = (batch_tiles, vocab_tiles); vocab axis innermost.

    Refs:
      ids_ref: (Bpad*T,)    int32 SMEM  flattened token ids (scalar prefetch)
      emb_ref: (V, D)       f32   VMEM  full embedding table (constant index)
      w_ref:   (D, TV)      bf16  VMEM  fc weight tile (pre-transposed)
      b_ref:   (1, TV)      f32   VMEM  fc bias tile (padded cols = -1e30)
      out_ref: (nv, TB, TV) f32         probs tiles; resident across vocab axis
      vc_ref:  (TB, D)      f32   scratch  mean context embedding
      m_ref:   (TB, 1)      f32   scratch  online-softmax running max
      l_ref:   (TB, 1)      f32   scratch  online-softmax running denom
    """
    bi = pl.program_id(0)
    vj = pl.program_id(1)
    TB, D = vc_ref.shape
    inv_T = 1.0 / T

    # ---- Phase A (vj == 0): embedding row gather + context mean, once per
    #      batch tile.  Ids come from SMEM; each row is a dynamic sublane
    #      slice of the f32 table.  Padded batch rows gather token 0. ----
    @pl.when(vj == 0)
    def _():
        m_ref[...] = jnp.full(m_ref.shape, -jnp.inf, m_ref.dtype)
        l_ref[...] = jnp.zeros(l_ref.shape, l_ref.dtype)
        base = bi * (TB * T)

        @pl.loop(0, TB)
        def _(b):
            acc = jnp.zeros((1, D), jnp.float32)
            for t in range(T):                          # T is small & static
                tok = ids_ref[base + b * T + t]         # SMEM scalar read
                acc = acc + emb_ref[pl.ds(tok, 1), :]   # (1, D) f32 row
            vc_ref[pl.ds(b, 1), :] = acc * inv_T

    # ---- Phase B (every vocab tile): stream the bf16 weight tile through the
    #      MXU, stash raw scores in the resident output tile, update the
    #      online-softmax running stats. ----
    vc = vc_ref[...].astype(jnp.bfloat16)               # (TB, D)
    scores = jnp.dot(vc, w_ref[...],
                     preferred_element_type=jnp.float32) + b_ref[...]
    m_prev = m_ref[...]
    m_new = jnp.maximum(m_prev, jnp.max(scores, axis=-1, keepdims=True))
    l_ref[...] = (l_ref[...] * jnp.exp(m_prev - m_new)
                  + jnp.sum(jnp.exp(scores - m_new), axis=-1, keepdims=True))
    m_ref[...] = m_new
    out_ref[vj] = scores                                # dynamic MAJOR-axis store

    # ---- Phase C (last vocab tile): single in-place exp + scale pass. ----
    @pl.when(vj == nv - 1)
    def _():
        m = m_ref[...]
        inv_l = 1.0 / l_ref[...]                        # exact; (TB,1) is tiny
        if nv <= 16:                                    # small nv: static unroll
            for j in range(nv):
                out_ref[j] = jnp.exp(out_ref[j] - m) * inv_l
        else:                                           # large nv: compact loop
            @pl.loop(0, nv)
            def _(j):
                out_ref[j] = jnp.exp(out_ref[j] - m) * inv_l


def make_fnn_lm_forward(emb_table, fc_weight, fc_bias, *, tile_b=128, tile_v=512):
    """Prepares padded/cast parameters ONCE (hoisted out of the per-call path)
    and returns a jitted `forward(context) -> probs[B, V]`.

    emb_table: f32 [V, D]; fc_weight: f32 [V, D] (torch Linear layout);
    fc_bias: f32 [V]; context: int32 [B, T] with ids in [0, V).
    """
    V, D = emb_table.shape
    assert fc_weight.shape == (V, D) and fc_bias.shape == (V,)
    assert tile_b % 8 == 0 and tile_v % 128 == 0

    TB = tile_b
    TV = min(tile_v, pl.cdiv(V, 128) * 128)
    Vpad = pl.cdiv(V, TV) * TV
    nv = Vpad // TV

    # ---- Parameter prep (runs once, not per forward call). ----
    emb_f32 = emb_table.astype(jnp.float32)                        # gather table
    w_p = (jnp.zeros((D, Vpad), jnp.bfloat16)
           .at[:, :V].set(fc_weight.T.astype(jnp.bfloat16)))       # bf16 stream
    # Padded vocab columns get bias -1e30 -> ~0 probability.  Every vocab tile
    # contains >= 1 real column by construction (Vpad = ceil(V/TV)*TV).
    b_p = (jnp.full((1, Vpad), -1e30, jnp.float32)
           .at[:, :V].set(fc_bias.reshape(1, V).astype(jnp.float32)))

    def forward_impl(context, emb_f32, w_p, b_p):
        B, T = context.shape
        Bpad = pl.cdiv(B, TB) * TB
        nb = Bpad // TB
        # NOTE(v7x): with 2 TensorCores, choose tile_b so nb >= 2 when B allows
        # it, otherwise one core idles on the "parallel" batch axis.

        # Flattened 1-D ids for compact SMEM residency; padded batch rows reuse
        # token 0 (their outputs are sliced away).  Ids are assumed in-range,
        # exactly like torch.nn.Embedding requires.
        ids = (jnp.zeros((Bpad, T), jnp.int32)
               .at[:B, :].set(context.astype(jnp.int32)).reshape(-1))

        # VMEM budget from buffer arithmetic (double-buffered pipeline bufs).
        vmem_bytes = (2 * V * D * 4                  # embedding table
                      + 2 * D * TV * 2               # weight tile
                      + 2 * 8 * TV * 4               # bias tile (sublane pad)
                      + 2 * nv * TB * TV * 4         # resident output block
                      + TB * D * 4                   # v_c scratch
                      + 2 * TB * 128 * 4)            # m/l scratch (lane pad)
        vmem_limit = int(min(max(2 * vmem_bytes, 16 * 2**20), 48 * 2**20))

        cost = pl.CostEstimate(
            flops=2 * Bpad * D * Vpad + 2 * Bpad * T * D,
            transcendentals=2 * Bpad * Vpad,
            bytes_accessed=(ids.size * 4 + V * D * 4
                            + nb * (D * Vpad * 2 + Vpad * 4)
                            + nb * nv * TB * TV * 4),
        )

        kernel = functools.partial(fnn_lm_kernel, T, nv)

        out = pl.pallas_call(
            kernel,
            out_shape=jax.ShapeDtypeStruct((nb * nv, TB, TV), jnp.float32),
            grid_spec=pltpu.PrefetchScalarGridSpec(
                num_scalar_prefetch=1,                  # ids -> SMEM
                grid=(nb, nv),                          # vocab axis innermost
                in_specs=[
                    pl.BlockSpec((V, D), lambda bi, vj, ids: (0, 0)),    # table
                    pl.BlockSpec((D, TV), lambda bi, vj, ids: (0, vj)),  # W tile
                    pl.BlockSpec((1, TV), lambda bi, vj, ids: (0, vj)),  # b tile
                ],
                out_specs=pl.BlockSpec((nv, TB, TV),
                                       lambda bi, vj, ids: (bi, 0, 0)),
                scratch_shapes=[
                    pltpu.VMEM((TB, D), jnp.float32),   # v_c
                    pltpu.VMEM((TB, 1), jnp.float32),   # running max
                    pltpu.VMEM((TB, 1), jnp.float32),   # running denom
                ],
            ),
            compiler_params=pltpu.CompilerParams(
                dimension_semantics=("parallel", "arbitrary"),
                vmem_limit_bytes=vmem_limit,
            ),
            cost_estimate=cost,
        )(ids, emb_f32, w_p, b_p)

        # Layout plumbing back to the PyTorch [B, V] view.
        probs = (out.reshape(nb, nv, TB, TV)
                 .transpose(0, 2, 1, 3)
                 .reshape(Bpad, Vpad))
        return probs[:B, :V]

    fwd = jax.jit(forward_impl)
    return lambda context: fwd(context, emb_f32, w_p, b_p)


def reference_forward(context, emb_table, fc_weight, fc_bias):
    embedded = jnp.take(emb_table, context, axis=0)          # [B, T, D]
    v_c = jnp.sum(embedded, axis=1) / embedded.shape[1]      # [B, D]
    scores = v_c @ fc_weight.T + fc_bias                     # [B, V]
    return jax.nn.softmax(scores, axis=1)


if __name__ == "__main__":
    vocab_size = 512
    embedding_dim = 64
    batch = 16
    context_len = 8

    key = jax.random.PRNGKey(0)
    k_emb, k_w, k_b, k_ctx = jax.random.split(key, 4)

    # embedding: init_method == 'normal' -> N(0, 1)
    emb_table = jax.random.normal(k_emb, (vocab_size, embedding_dim),
                                  dtype=jnp.float32)
    # fc Linear: Kaiming-uniform-like bounds U(-1/sqrt(fan_in), 1/sqrt(fan_in))
    bound = 1.0 / float(embedding_dim) ** 0.5
    fc_weight = jax.random.uniform(k_w, (vocab_size, embedding_dim),
                                   minval=-bound, maxval=bound,
                                   dtype=jnp.float32)
    fc_bias = jax.random.uniform(k_b, (vocab_size,),
                                 minval=-bound, maxval=bound,
                                 dtype=jnp.float32)
    context = jax.random.randint(k_ctx, (batch, context_len),
                                 minval=0, maxval=vocab_size, dtype=jnp.int32)

    ref = reference_forward(context, emb_table, fc_weight, fc_bias)

    # Config 1: small vocab tile -> exercises multi-tile weight streaming,
    # the online softmax, and batch padding (B=16 -> TB=128).
    fwd_tiled = make_fnn_lm_forward(emb_table, fc_weight, fc_bias,
                                    tile_b=128, tile_v=128)
    probs = jax.block_until_ready(fwd_tiled(context))
    assert probs.shape == (batch, vocab_size)
    assert jnp.allclose(probs, ref, atol=1e-3, rtol=3e-2), "mismatch (tiled)"
    assert jnp.allclose(jnp.sum(probs, axis=1), 1.0, atol=1e-3), \
        "rows must sum to 1"

    # Config 2: default tiles (single vocab tile at this toy vocab size).
    fwd_default = make_fnn_lm_forward(emb_table, fc_weight, fc_bias)
    probs2 = jax.block_until_ready(fwd_default(context))
    assert jnp.allclose(probs2, ref, atol=1e-3, rtol=3e-2), "mismatch (default)"

    print("KERNEL_OK")
</pallas_src>

<mosaic_0001>
module attributes {stable_mosaic.version = 11 : i64} {
  func.func @fnn_lm_kernel(%arg0: i32, %arg1: i32, %arg2: memref<1024xi32, #tpu.memory_space<smem>>, %arg3: memref<512x64xf32, #tpu.memory_space<vmem>>, %arg4: memref<64x128xbf16, #tpu.memory_space<vmem>>, %arg5: memref<1x128xf32, #tpu.memory_space<vmem>>, %arg6: memref<4x128x128xf32, #tpu.memory_space<vmem>>, %arg7: memref<128x64xf32, #tpu.memory_space<vmem>>, %arg8: memref<128x1xf32, #tpu.memory_space<vmem>>, %arg9: memref<128x1xf32, #tpu.memory_space<vmem>>) attributes {dimension_semantics = [#tpu.dimension_semantics<parallel>, #tpu.dimension_semantics<arbitrary>], iteration_bounds = array<i64: 1, 4>, scalar_prefetch = 1 : i64, scratch_operands = 3 : i64, tpu.core_type = #tpu.core_type<tc>, window_params = [{pipeline_mode = #tpu.pipeline_mode<synchronous>, transform_indices = @transform_0, window_bounds = array<i64: 512, 64>}, {transform_indices = @transform_1, window_bounds = array<i64: 64, 128>}, {transform_indices = @transform_2, window_bounds = array<i64: 1, 128>}, {transform_indices = @transform_3, window_bounds = array<i64: 4, 128, 128>}]} {
    %c0_i32 = arith.constant 0 : i32
    %0 = arith.cmpi eq, %arg1, %c0_i32 : i32
    %1 = arith.extui %0 : i1 to i32
    %c0_i32_0 = arith.constant 0 : i32
    %2 = arith.cmpi ne, %1, %c0_i32_0 : i32
    scf.if %2 {
      %cst_19 = arith.constant 0xFF800000 : f32
      %33 = vector.broadcast %cst_19 : f32 to vector<128x1xf32>
      %c0_20 = arith.constant 0 : index
      %c0_21 = arith.constant 0 : index
      %34 = vector.load %arg8[%c0_20, %c0_21] : memref<128x1xf32, #tpu.memory_space<vmem>>, vector<128x1xf32>
      tpu.vector_store %arg8[%c0_20, %c0_21], %33 {strides = array<i32>} : memref<128x1xf32, #tpu.memory_space<vmem>>, vector<128x1xf32>,
      %cst_22 = arith.constant 0.000000e+00 : f32
      %35 = vector.broadcast %cst_22 : f32 to vector<128x1xf32>
      %c0_23 = arith.constant 0 : index
      %c0_24 = arith.constant 0 : index
      %36 = vector.load %arg9[%c0_23, %c0_24] : memref<128x1xf32, #tpu.memory_space<vmem>>, vector<128x1xf32>
      tpu.vector_store %arg9[%c0_23, %c0_24], %35 {strides = array<i32>} : memref<128x1xf32, #tpu.memory_space<vmem>>, vector<128x1xf32>,
      %c1024_i32 = arith.constant 1024 : i32
      %37 = arith.muli %arg0, %c1024_i32 : i32
      %c0_i32_25 = arith.constant 0 : i32
      %c128_i32 = arith.constant 128 : i32
      %38 = arith.addi %c0_i32_25, %c128_i32 : i32
      %c1_i32 = arith.constant 1 : i32
      scf.for %arg10 = %c0_i32_25 to %38 step %c1_i32  : i32 {
        %c1_i32_27 = arith.constant 1 : i32
        %39 = arith.muli %arg10, %c1_i32_27 : i32
        %c0_i32_28 = arith.constant 0 : i32
        %40 = arith.addi %c0_i32_28, %39 : i32
        %cst_29 = arith.constant 0.000000e+00 : f32
        %41 = vector.broadcast %cst_29 : f32 to vector<1x64xf32>
        %c8_i32 = arith.constant 8 : i32
        %42 = arith.muli %40, %c8_i32 : i32
        %43 = arith.addi %37, %42 : i32
        %c0_i32_30 = arith.constant 0 : i32
        %44 = arith.addi %43, %c0_i32_30 : i32
        %45 = arith.index_cast %44 : i32 to index
        %46 = memref.load %arg2[%45] : memref<1024xi32, #tpu.memory_space<smem>>
        %47 = arith.index_cast %46 : i32 to index
        %c0_31 = arith.constant 0 : index
        %48 = vector.load %arg3[%47, %c0_31] : memref<512x64xf32, #tpu.memory_space<vmem>>, vector<1x64xf32>
        %49 = arith.addf %41, %48 : vector<1x64xf32>
        %c8_i32_32 = arith.constant 8 : i32
        %50 = arith.muli %40, %c8_i32_32 : i32
        %51 = arith.addi %37, %50 : i32
        %c1_i32_33 = arith.constant 1 : i32
        %52 = arith.addi %51, %c1_i32_33 : i32
        %53 = arith.index_cast %52 : i32 to index
        %54 = memref.load %arg2[%53] : memref<1024xi32, #tpu.memory_space<smem>>
        %55 = arith.index_cast %54 : i32 to index
        %c0_34 = arith.constant 0 : index
        %56 = vector.load %arg3[%55, %c0_34] : memref<512x64xf32, #tpu.memory_space<vmem>>, vector<1x64xf32>
        %57 = arith.addf %49, %56 : vector<1x64xf32>
        %c8_i32_35 = arith.constant 8 : i32
        %58 = arith.muli %40, %c8_i32_35 : i32
        %59 = arith.addi %37, %58 : i32
        %c2_i32 = arith.constant 2 : i32
        %60 = arith.addi %59, %c2_i32 : i32
        %61 = arith.index_cast %60 : i32 to index
        %62 = memref.load %arg2[%61] : memref<1024xi32, #tpu.memory_space<smem>>
        %63 = arith.index_cast %62 : i32 to index
        %c0_36 = arith.constant 0 : index
        %64 = vector.load %arg3[%63, %c0_36] : memref<512x64xf32, #tpu.memory_space<vmem>>, vector<1x64xf32>
        %65 = arith.addf %57, %64 : vector<1x64xf32>
        %c8_i32_37 = arith.constant 8 : i32
        %66 = arith.muli %40, %c8_i32_37 : i32
        %67 = arith.addi %37, %66 : i32
        %c3_i32_38 = arith.constant 3 : i32
        %68 = arith.addi %67, %c3_i32_38 : i32
        %69 = arith.index_cast %68 : i32 to index
        %70 = memref.load %arg2[%69] : memref<1024xi32, #tpu.memory_space<smem>>
        %71 = arith.index_cast %70 : i32 to index
        %c0_39 = arith.constant 0 : index
        %72 = vector.load %arg3[%71, %c0_39] : memref<512x64xf32, #tpu.memory_space<vmem>>, vector<1x64xf32>
        %73 = arith.addf %65, %72 : vector<1x64xf32>
        %c8_i32_40 = arith.constant 8 : i32
        %74 = arith.muli %40, %c8_i32_40 : i32
        %75 = arith.addi %37, %74 : i32
        %c4_i32 = arith.constant 4 : i32
        %76 = arith.addi %75, %c4_i32 : i32
        %77 = arith.index_cast %76 : i32 to index
        %78 = memref.load %arg2[%77] : memref<1024xi32, #tpu.memory_space<smem>>
        %79 = arith.index_cast %78 : i32 to index
        %c0_41 = arith.constant 0 : index
        %80 = vector.load %arg3[%79, %c0_41] : memref<512x64xf32, #tpu.memory_space<vmem>>, vector<1x64xf32>
        %81 = arith.addf %73, %80 : vector<1x64xf32>
        %c8_i32_42 = arith.constant 8 : i32
        %82 = arith.muli %40, %c8_i32_42 : i32
        %83 = arith.addi %37, %82 : i32
        %c5_i32 = arith.constant 5 : i32
        %84 = arith.addi %83, %c5_i32 : i32
        %85 = arith.index_cast %84 : i32 to index
        %86 = memref.load %arg2[%85] : memref<1024xi32, #tpu.memory_space<smem>>
        %87 = arith.index_cast %86 : i32 to index
        %c0_43 = arith.constant 0 : index
        %88 = vector.load %arg3[%87, %c0_43] : memref<512x64xf32, #tpu.memory_space<vmem>>, vector<1x64xf32>
        %89 = arith.addf %81, %88 : vector<1x64xf32>
        %c8_i32_44 = arith.constant 8 : i32
        %90 = arith.muli %40, %c8_i32_44 : i32
        %91 = arith.addi %37, %90 : i32
        %c6_i32 = arith.constant 6 : i32
        %92 = arith.addi %91, %c6_i32 : i32
        %93 = arith.index_cast %92 : i32 to index
        %94 = memref.load %arg2[%93] : memref<1024xi32, #tpu.memory_space<smem>>
        %95 = arith.index_cast %94 : i32 to index
        %c0_45 = arith.constant 0 : index
        %96 = vector.load %arg3[%95, %c0_45] : memref<512x64xf32, #tpu.memory_space<vmem>>, vector<1x64xf32>
        %97 = arith.addf %89, %96 : vector<1x64xf32>
        %c8_i32_46 = arith.constant 8 : i32
        %98 = arith.muli %40, %c8_i32_46 : i32
        %99 = arith.addi %37, %98 : i32
        %c7_i32 = arith.constant 7 : i32
        %100 = arith.addi %99, %c7_i32 : i32
        %101 = arith.index_cast %100 : i32 to index
        %102 = memref.load %arg2[%101] : memref<1024xi32, #tpu.memory_space<smem>>
        %103 = arith.index_cast %102 : i32 to index
        %c0_47 = arith.constant 0 : index
        %104 = vector.load %arg3[%103, %c0_47] : memref<512x64xf32, #tpu.memory_space<vmem>>, vector<1x64xf32>
        %105 = arith.addf %97, %104 : vector<1x64xf32>
        %cst_48 = arith.constant 1.250000e-01 : f32
        %106 = vector.broadcast %cst_48 : f32 to vector<1x64xf32>
        %107 = arith.mulf %105, %106 : vector<1x64xf32>
        %108 = arith.index_cast %40 : i32 to index
        %c0_49 = arith.constant 0 : index
        %109 = vector.load %arg7[%108, %c0_49] : memref<128x64xf32, #tpu.memory_space<vmem>>, vector<1x64xf32>
        tpu.vector_store %arg7[%108, %c0_49], %107 {strides = array<i32>} : memref<128x64xf32, #tpu.memory_space<vmem>>, vector<1x64xf32>,
      }
      %c128_i32_26 = arith.constant 128 : i32
    } else {
    }
    %c0 = arith.constant 0 : index
    %c0_1 = arith.constant 0 : index
    %3 = vector.load %arg7[%c0, %c0_1] : memref<128x64xf32, #tpu.memory_space<vmem>>, vector<128x64xf32>
    %4 = arith.truncf %3 : vector<128x64xf32> to vector<128x64xbf16>
    %c0_2 = arith.constant 0 : index
    %c0_3 = arith.constant 0 : index
    %5 = vector.load %arg4[%c0_2, %c0_3] : memref<64x128xbf16, #tpu.memory_space<vmem>>, vector<64x128xbf16>
    %cst = arith.constant dense<0.000000e+00> : vector<128x128xf32>
    %6 = tpu.matmul %4, %5, %cst {dimension_numbers = #tpu.dot_dimension_numbers<[1], [0], [0], [1], [0, 0, 1, 1], [], []>} : vector<128x64xbf16>, vector<64x128xbf16>, vector<128x128xf32> -> vector<128x128xf32>
    %c0_4 = arith.constant 0 : index
    %c0_5 = arith.constant 0 : index
    %7 = vector.load %arg5[%c0_4, %c0_5] : memref<1x128xf32, #tpu.memory_space<vmem>>, vector<1x128xf32>
    %8 = vector.broadcast %7 : vector<1x128xf32> to vector<128x128xf32>
    %9 = arith.addf %6, %8 : vector<128x128xf32>
    %c0_6 = arith.constant 0 : index
    %c0_7 = arith.constant 0 : index
    %10 = vector.load %arg8[%c0_6, %c0_7] : memref<128x1xf32, #tpu.memory_space<vmem>>, vector<128x1xf32>
    %cst_8 = arith.constant dense<0xFF800000> : vector<128xf32>
    %11 = vector.multi_reduction <maximumf>, %9, %cst_8 [1] : vector<128x128xf32> to vector<128xf32>
    %12 = vector.shape_cast %11 : vector<128xf32> to vector<128x1xf32>
    %13 = arith.maximumf %10, %12 : vector<128x1xf32>
    %c0_9 = arith.constant 0 : index
    %c0_10 = arith.constant 0 : index
    %14 = vector.load %arg9[%c0_9, %c0_10] : memref<128x1xf32, #tpu.memory_space<vmem>>, vector<128x1xf32>
    %15 = arith.subf %10, %13 : vector<128x1xf32>
    %16 = math.exp %15 : vector<128x1xf32>
    %17 = arith.mulf %14, %16 : vector<128x1xf32>
    %18 = vector.broadcast %13 : vector<128x1xf32> to vector<128x128xf32>
    %19 = arith.subf %9, %18 : vector<128x128xf32>
    %20 = math.exp %19 : vector<128x128xf32>
    %cst_11 = arith.constant dense<0.000000e+00> : vector<128xf32>
    %21 = vector.multi_reduction <add>, %20, %cst_11 [1] : vector<128x128xf32> to vector<128xf32>
    %22 = vector.shape_cast %21 : vector<128xf32> to vector<128x1xf32>
    %23 = arith.addf %17, %22 : vector<128x1xf32>
    %c0_12 = arith.constant 0 : index
    %c0_13 = arith.constant 0 : index
    %24 = vector.load %arg9[%c0_12, %c0_13] : memref<128x1xf32, #tpu.memory_space<vmem>>, vector<128x1xf32>
    tpu.vector_store %arg9[%c0_12, %c0_13], %23 {strides = array<i32>} : memref<128x1xf32, #tpu.memory_space<vmem>>, vector<128x1xf32>,
    %c0_14 = arith.constant 0 : index
    %c0_15 = arith.constant 0 : index
    %25 = vector.load %arg8[%c0_14, %c0_15] : memref<128x1xf32, #tpu.memory_space<vmem>>, vector<128x1xf32>
    tpu.vector_store %arg8[%c0_14, %c0_15], %13 {strides = array<i32>} : memref<128x1xf32, #tpu.memory_space<vmem>>, vector<128x1xf32>,
    %26 = arith.index_cast %arg1 : i32 to index
    %c0_16 = arith.constant 0 : index
    %c0_17 = arith.constant 0 : index
    %27 = vector.load %arg6[%26, %c0_16, %c0_17] : memref<4x128x128xf32, #tpu.memory_space<vmem>>, vector<1x128x128xf32>
    %28 = vector.shape_cast %27 : vector<1x128x128xf32> to vector<128x128xf32>
    %29 = vector.shape_cast %9 : vector<128x128xf32> to vector<1x128x128xf32>
    tpu.vector_store %arg6[%26, %c0_16, %c0_17], %29 {strides = array<i32>} : memref<4x128x128xf32, #tpu.memory_space<vmem>>, vector<1x128x128xf32>,
    %c3_i32 = arith.constant 3 : i32
    %30 = arith.cmpi eq, %arg1, %c3_i32 : i32
    %31 = arith.extui %30 : i1 to i32
    %c0_i32_18 = arith.constant 0 : i32
    %32 = arith.cmpi ne, %31, %c0_i32_18 : i32
    scf.if %32 {
      %c0_19 = arith.constant 0 : index
      %c0_20 = arith.constant 0 : index
      %33 = vector.load %arg8[%c0_19, %c0_20] : memref<128x1xf32, #tpu.memory_space<vmem>>, vector<128x1xf32>
      %c0_21 = arith.constant 0 : index
      %c0_22 = arith.constant 0 : index
      %34 = vector.load %arg9[%c0_21, %c0_22] : memref<128x1xf32, #tpu.memory_space<vmem>>, vector<128x1xf32>
      %cst_23 = arith.constant 1.000000e+00 : f32
      %35 = vector.broadcast %cst_23 : f32 to vector<128x1xf32>
      %36 = arith.divf %35, %34 : vector<128x1xf32>
      %c0_24 = arith.constant 0 : index
      %c0_25 = arith.constant 0 : index
      %c0_26 = arith.constant 0 : index
      %37 = vector.load %arg6[%c0_24, %c0_25, %c0_26] : memref<4x128x128xf32, #tpu.memory_space<vmem>>, vector<1x128x128xf32>
      %38 = vector.shape_cast %37 : vector<1x128x128xf32> to vector<128x128xf32>
      %39 = vector.broadcast %33 : vector<128x1xf32> to vector<128x128xf32>
      %40 = arith.subf %38, %39 : vector<128x128xf32>
      %41 = math.exp %40 : vector<128x128xf32>
      %42 = vector.broadcast %36 : vector<128x1xf32> to vector<128x128xf32>
      %43 = arith.mulf %41, %42 : vector<128x128xf32>
      %c0_27 = arith.constant 0 : index
      %c0_28 = arith.constant 0 : index
      %c0_29 = arith.constant 0 : index
      %44 = vector.load %arg6[%c0_27, %c0_28, %c0_29] : memref<4x128x128xf32, #tpu.memory_space<vmem>>, vector<1x128x128xf32>
      %45 = vector.shape_cast %44 : vector<1x128x128xf32> to vector<128x128xf32>
      %46 = vector.shape_cast %43 : vector<128x128xf32> to vector<1x128x128xf32>
      tpu.vector_store %arg6[%c0_27, %c0_28, %c0_29], %46 {strides = array<i32>} : memref<4x128x128xf32, #tpu.memory_space<vmem>>, vector<1x128x128xf32>,
      %c1 = arith.constant 1 : index
      %c0_30 = arith.constant 0 : index
      %c0_31 = arith.constant 0 : index
      %47 = vector.load %arg6[%c1, %c0_30, %c0_31] : memref<4x128x128xf32, #tpu.memory_space<vmem>>, vector<1x128x128xf32>
      %48 = vector.shape_cast %47 : vector<1x128x128xf32> to vector<128x128xf32>
      %49 = vector.broadcast %33 : vector<128x1xf32> to vector<128x128xf32>
      %50 = arith.subf %48, %49 : vector<128x128xf32>
      %51 = math.exp %50 : vector<128x128xf32>
      %52 = vector.broadcast %36 : vector<128x1xf32> to vector<128x128xf32>
      %53 = arith.mulf %51, %52 : vector<128x128xf32>
      %c1_32 = arith.constant 1 : index
      %c0_33 = arith.constant 0 : index
      %c0_34 = arith.constant 0 : index
      %54 = vector.load %arg6[%c1_32, %c0_33, %c0_34] : memref<4x128x128xf32, #tpu.memory_space<vmem>>, vector<1x128x128xf32>
      %55 = vector.shape_cast %54 : vector<1x128x128xf32> to vector<128x128xf32>
      %56 = vector.shape_cast %53 : vector<128x128xf32> to vector<1x128x128xf32>
      tpu.vector_store %arg6[%c1_32, %c0_33, %c0_34], %56 {strides = array<i32>} : memref<4x128x128xf32, #tpu.memory_space<vmem>>, vector<1x128x128xf32>,
      %c2 = arith.constant 2 : index
      %c0_35 = arith.constant 0 : index
      %c0_36 = arith.constant 0 : index
      %57 = vector.load %arg6[%c2, %c0_35, %c0_36] : memref<4x128x128xf32, #tpu.memory_space<vmem>>, vector<1x128x128xf32>
      %58 = vector.shape_cast %57 : vector<1x128x128xf32> to vector<128x128xf32>
      %59 = vector.broadcast %33 : vector<128x1xf32> to vector<128x128xf32>
      %60 = arith.subf %58, %59 : vector<128x128xf32>
      %61 = math.exp %60 : vector<128x128xf32>
      %62 = vector.broadcast %36 : vector<128x1xf32> to vector<128x128xf32>
      %63 = arith.mulf %61, %62 : vector<128x128xf32>
      %c2_37 = arith.constant 2 : index
      %c0_38 = arith.constant 0 : index
      %c0_39 = arith.constant 0 : index
      %64 = vector.load %arg6[%c2_37, %c0_38, %c0_39] : memref<4x128x128xf32, #tpu.memory_space<vmem>>, vector<1x128x128xf32>
      %65 = vector.shape_cast %64 : vector<1x128x128xf32> to vector<128x128xf32>
      %66 = vector.shape_cast %63 : vector<128x128xf32> to vector<1x128x128xf32>
      tpu.vector_store %arg6[%c2_37, %c0_38, %c0_39], %66 {strides = array<i32>} : memref<4x128x128xf32, #tpu.memory_space<vmem>>, vector<1x128x128xf32>,
      %c3 = arith.constant 3 : index
      %c0_40 = arith.constant 0 : index
      %c0_41 = arith.constant 0 : index
      %67 = vector.load %arg6[%c3, %c0_40, %c0_41] : memref<4x128x128xf32, #tpu.memory_space<vmem>>, vector<1x128x128xf32>
      %68 = vector.shape_cast %67 : vector<1x128x128xf32> to vector<128x128xf32>
      %69 = vector.broadcast %33 : vector<128x1xf32> to vector<128x128xf32>
      %70 = arith.subf %68, %69 : vector<128x128xf32>
      %71 = math.exp %70 : vector<128x128xf32>
      %72 = vector.broadcast %36 : vector<128x1xf32> to vector<128x128xf32>
      %73 = arith.mulf %71, %72 : vector<128x128xf32>
      %c3_42 = arith.constant 3 : index
      %c0_43 = arith.constant 0 : index
      %c0_44 = arith.constant 0 : index
      %74 = vector.load %arg6[%c3_42, %c0_43, %c0_44] : memref<4x128x128xf32, #tpu.memory_space<vmem>>, vector<1x128x128xf32>
      %75 = vector.shape_cast %74 : vector<1x128x128xf32> to vector<128x128xf32>
      %76 = vector.shape_cast %73 : vector<128x128xf32> to vector<1x128x128xf32>
      tpu.vector_store %arg6[%c3_42, %c0_43, %c0_44], %76 {strides = array<i32>} : memref<4x128x128xf32, #tpu.memory_space<vmem>>, vector<1x128x128xf32>,
    } else {
    }
    return
  }
  func.func @transform_0(%arg0: i32, %arg1: i32, %arg2: memref<1024xi32, #tpu.memory_space<smem>>) -> (i32, i32) {
    %c0_i32 = arith.constant 0 : i32
    %c0_i32_0 = arith.constant 0 : i32
    %c0_i32_1 = arith.constant 0 : i32
    return %c0_i32, %c0_i32_0 : i32, i32
  }
  func.func @transform_1(%arg0: i32, %arg1: i32, %arg2: memref<1024xi32, #tpu.memory_space<smem>>) -> (i32, i32) {
    %c0_i32 = arith.constant 0 : i32
    %c0_i32_0 = arith.constant 0 : i32
    return %c0_i32, %arg1 : i32, i32
  }
  func.func @transform_2(%arg0: i32, %arg1: i32, %arg2: memref<1024xi32, #tpu.memory_space<smem>>) -> (i32, i32) {
    %c0_i32 = arith.constant 0 : i32
    %c0_i32_0 = arith.constant 0 : i32
    return %c0_i32, %arg1 : i32, i32
  }
  func.func @transform_3(%arg0: i32, %arg1: i32, %arg2: memref<1024xi32, #tpu.memory_space<smem>>) -> (i32, i32, i32) {
    %c0_i32 = arith.constant 0 : i32
    %c0_i32_0 = arith.constant 0 : i32
    %c0_i32_1 = arith.constant 0 : i32
    return %arg0, %c0_i32, %c0_i32_0 : i32, i32, i32
  }
}

</mosaic_0001>

<llo_original>
// kernel: forward_impl.1
$region0: #{forward_impl.1}
  #allocation0 [shape = 'u32[]', space=smem, size = 0x4, offset = 0x4, fixed_abs, tag = 'smem constant byte address 0x4 - core index']
  #allocation1 [shape = 'u32[144,128]{1,0:T(1,128)}', space=vmem, size = 0x12000, scoped, tag = 'internal scratch']
  #allocation2 [shape = 'f32[128,64]{1,0:T(8,128)}', space=vmem, size = 0x10000, scoped, tag = 'scratch operand']
  #allocation3 [shape = 'f32[128,1]{1,0:T(8,128)}', space=vmem, size = 0x10000, scoped, tag = 'scratch operand']
  #allocation4 [shape = 'f32[128,1]{1,0:T(8,128)}', space=vmem, size = 0x10000, scoped, tag = 'scratch operand']
  #allocation5 [shape = 's32[1]{0}', space=sflag, size = 0x4, scoped, tag = 'scoped memory for forward_impl.1']
  #allocation6 [shape = 'u8[4096]{0}', space=smem, size = 0x1000, scoped, tag = 'prefetched SMEM operand 0']
  %s0 = inlined_call_operand.vmem [shape: s32[1024], index: 0, kind: input, shape index: {}]
  %s1 = inlined_call_operand.vmem [shape: f32[512,64], index: 1, kind: input, shape index: {}]
  %s2 = inlined_call_operand.vmem [shape: bf16[64,512], index: 2, kind: input, shape index: {}]
  %s3 = inlined_call_operand.vmem [shape: f32[1,512], index: 3, kind: input, shape index: {}]
  %s4 = inlined_call_operand.vmem [shape: f32[4,128,128], index: 4, kind: output, shape index: {}]
  %s5 = sld [smem:[#allocation0]]
  $region101: #{forward_impl.1} parent=0
    _
  %s7 = ssub.s32 1, %s5
  %s8 = scalar_select 0, %s7, %s5
  %s9 = sshll.u32 %s0, 4
  %s10 = int_to_ptr.vmem [resolvable:$true] %s9
  %12 = dma.vmem_to_smem %s10, 128, [#allocation6], [#allocation5]
  %13 = dma.done [#allocation5], 128
  %14 = sfence
  $region1: #{forward_impl.1} parent=0
    #allocation7 [shape = 'u8[32768]{0}', space=vmem, size = 0x8000, scoped, tag = 'input window, operand 2']
    loop: start=0, step=1, limit=6
    $region2: #{forward_impl.1} parent=1 // loop_pre_header
      _
    $region3: #{forward_impl.1} parent=1 // loop_header
      %s16 = sphi 0, %s20
      %p17 = scmp.ge.s32.totalorder %s16, 6
      %s23 = sphi 0, %s35
      %s24 = sphi 0, %s31
      %s25 = sphi 0, %s23
      %s26 = sphi 0, %s24
      %s27 = sphi 0, %s25
      %s28 = sphi 0, %s26
      %s36 = sphi 0, %s36
      %s38 = sphi 0, %s36
      %s39 = sphi 0, %s38
      %s53 = sphi 0, %s39
      %s59 = sphi 0, %s61
      %s62 = sphi 0, %s59
      %s63 = sphi 0, %s62
      %s79 = sphi 0, %s63
      %s85 = sphi 0, %s87
      %s88 = sphi 0, %s85
      %s89 = sphi 0, %s88
      %s105 = sphi 0, %s89
      %s111 = sphi 0, %s113
      %s114 = sphi 0, %s111
      %s115 = sphi 0, %s114
      %s131 = sphi 0, %s115
    $region4: #{forward_impl.1} parent=1 // loop_header_branch
      %19 = sbr.rel (%p17) target = $region8
    $region5: #{forward_impl.1} parent=1 // loop_body
      %s21 = ssub.s32 %s16, 1
      %s22 = ssub.s32 %s16, 2
      %s29 = sadd.s32 1, %s24
      %p30 = scmp.ge.s32.totalorder %s29, 4
      %s31 = scalar_select %p30, 0, %s29
      %s32 = sadd.s32 1, %s23
      %s33 = scalar_select %p30, %s32, %s23
      %p34 = scmp.ge.s32.totalorder %s33, 1
      %s35 = scalar_select %p34, 0, %s33
      %s37 = sadd.s32 %s36, 1
      %p40 = scmp.eq.s32.totalorder %s16, 3
      %p41 = scmp.ne.s32.totalorder %s36, %s38
      %p42 = scmp.eq.s32.totalorder %s16, 0
      %p43 = por %p41, %p42
      %p44 = scmp.ne.s32.totalorder %s36, %s38
      %p45 = scmp.eq.s32.totalorder %s21, 3
      %p46 = por %p44, %p45
      %p47 = scmp.ne.s32.totalorder %s38, %s39
      %p48 = scmp.eq.s32.totalorder %s21, 0
      %p49 = por %p47, %p48
      %p50 = scmp.ne.s32.totalorder %s38, %s39
      %p51 = scmp.eq.s32.totalorder %s22, 3
      %p52 = por %p50, %p51
      %p54 = scmp.ne.s32.totalorder %s39, %s53
      %p55 = scmp.eq.s32.totalorder %s22, 0
      %p56 = por %p54, %p55
      %s57 = ssub.s32 %s24, %s31
      %p58 = scmp.eq.s32.totalorder %s57, 0
      %s60 = sadd.s32 %s59, 1
      %s61 = scalar_select %p58, %s59, %s60
      %p64 = pneg %p58
      %p65 = scmp.eq.s32.totalorder %s16, 3
      %p66 = por %p64, %p65
      %p67 = scmp.ne.s32.totalorder %s59, %s62
      %p68 = scmp.eq.s32.totalorder %s16, 0
      %p69 = por %p67, %p68
      %p70 = scmp.ne.s32.totalorder %s59, %s62
      %p71 = scmp.eq.s32.totalorder %s21, 3
      %p72 = por %p70, %p71
      %p73 = scmp.ne.s32.totalorder %s62, %s63
      %p74 = scmp.eq.s32.totalorder %s21, 0
      %p75 = por %p73, %p74
      %p76 = scmp.ne.s32.totalorder %s62, %s63
      %p77 = scmp.eq.s32.totalorder %s22, 3
      %p78 = por %p76, %p77
      %p80 = scmp.ne.s32.totalorder %s63, %s79
      %p81 = scmp.eq.s32.totalorder %s22, 0
      %p82 = por %p80, %p81
      %s83 = ssub.s32 %s24, %s31
      %p84 = scmp.eq.s32.totalorder %s83, 0
      %s86 = sadd.s32 %s85, 1
      %s87 = scalar_select %p84, %s85, %s86
      %p90 = pneg %p84
      %p91 = scmp.eq.s32.totalorder %s16, 3
      %p92 = por %p90, %p91
      %p93 = scmp.ne.s32.totalorder %s85, %s88
      %p94 = scmp.eq.s32.totalorder %s16, 0
      %p95 = por %p93, %p94
      %p96 = scmp.ne.s32.totalorder %s85, %s88
      %p97 = scmp.eq.s32.totalorder %s21, 3
      %p98 = por %p96, %p97
      %p99 = scmp.ne.s32.totalorder %s88, %s89
      %p100 = scmp.eq.s32.totalorder %s21, 0
      %p101 = por %p99, %p100
      %p102 = scmp.ne.s32.totalorder %s88, %s89
      %p103 = scmp.eq.s32.totalorder %s22, 3
      %p104 = por %p102, %p103
      %p106 = scmp.ne.s32.totalorder %s89, %s105
      %p107 = scmp.eq.s32.totalorder %s22, 0
      %p108 = por %p106, %p107
      %s109 = ssub.s32 %s23, %s35
      %p110 = scmp.eq.s32.totalorder %s109, 0
      %s112 = sadd.s32 %s111, 1
      %s113 = scalar_select %p110, %s111, %s112
      %p116 = pneg %p110
      %p117 = scmp.eq.s32.totalorder %s16, 3
      %p118 = por %p116, %p117
      %p119 = scmp.ne.s32.totalorder %s111, %s114
      %p120 = scmp.eq.s32.totalorder %s16, 0
      %p121 = por %p119, %p120
      %p122 = scmp.ne.s32.totalorder %s111, %s114
      %p123 = scmp.eq.s32.totalorder %s21, 3
      %p124 = por %p122, %p123
      %p125 = scmp.ne.s32.totalorder %s114, %s115
      %p126 = scmp.eq.s32.totalorder %s21, 0
      %p127 = por %p125, %p126
      %p128 = scmp.ne.s32.totalorder %s114, %s115
      %p129 = scmp.eq.s32.totalorder %s22, 3
      %p130 = por %p128, %p129
      %p132 = scmp.ne.s32.totalorder %s115, %s131
      %p133 = scmp.eq.s32.totalorder %s22, 0
      %p134 = por %p132, %p133
      %p135 = scmp.le.s32.totalorder 1, %s16
      %p136 = scmp.lt.s32.totalorder %s16, 5
      %p137 = pnand %p135, %p136
      %p138 = pneg %p137
      // Predicated region
      $region9: #{forward_impl.1} parent=5 // pred_check
        _
      $region10: #{forward_impl.1} parent=5 // pred_check_branch
        %140 = sbr.rel (%p137) target = $region12
      $region11: #{forward_impl.1} parent=5 // pred_region
        %s141 = ssub.s32 %s16, 1
        // Predicated region
        $region13: #{forward_impl.1} parent=11 // pred_check
          %p142 = pneg %p49
        $region14: #{forward_impl.1} parent=11 // pred_check_branch
          %144 = sbr.rel (%p142) target = $region16
        $region15: #{forward_impl.1} parent=11 // pred_region
          _
        $region16: #{forward_impl.1} parent=11 // pred_fallthru
          _
      $region12: #{forward_impl.1} parent=5 // pred_fallthru
        _
      %p145 = scmp.lt.s32.totalorder %s16, 4
      // Predicated region
      $region17: #{forward_impl.1} parent=5 // pred_check
        %p146 = pneg %p145
      $region18: #{forward_impl.1} parent=5 // pred_check_branch
        %148 = sbr.rel (%p146) target = $region20
      $region19: #{forward_impl.1} parent=5 // pred_region
        // Predicated region
        $region21: #{forward_impl.1} parent=19 // pred_check
          %p149 = pneg %p69
        $region22: #{forward_impl.1} parent=19 // pred_check_branch
          %151 = sbr.rel (%p149) target = $region24
        $region23: #{forward_impl.1} parent=19 // pred_region
          %s152 = sand.u32 %s59, 1
          %s153 = sand.u32 %s59, 1
          %s154 = smul.addr %s153, 32
          %s155 = scalar_lea.vmem [#allocation7], %s154
          %s156 = smul.addr %s24, 4
          %s157 = scalar_lea.vmem %s2, %s156
          // Predicated region
          $region25: #{forward_impl.1} parent=23 // pred_check
            _
          $region26: #{forward_impl.1} parent=23 // pred_check_branch
            %159 = sbr.rel (0) target = $region28
          $region27: #{forward_impl.1} parent=23 // pred_region
            // Predicated region
            $region29: #{forward_impl.1} parent=27 // pred_check
              _
            $region30: #{forward_impl.1} parent=27 // pred_check_branch
              %161 = sbr.rel target = $region32
            $region31: #{forward_impl.1} parent=27 // pred_region
              // Predicated region
              $region44: #{forward_impl.1} parent=31 // pred_check
                _
              $region45: #{forward_impl.1} parent=31 // pred_check_branch
                %190 = sbr.rel (0) target = $region47
              $region46: #{forward_impl.1} parent=31 // pred_region
                loop: start=0, step=1, limit=1
                $region48: #{forward_impl.1} parent=46 // loop_pre_header
                  _
                $region49: #{forward_impl.1} parent=46 // loop_header
                  %s192 = sphi 0, %s196
                  %p193 = scmp.ge.s32.totalorder %s192, 1
                  %s197 = sphi %s157, %s157
                  %s198 = sphi %s155, %s155
                $region50: #{forward_impl.1} parent=46 // loop_header_branch
                  %195 = sbr.rel (%p193) target = $region54
                $region51: #{forward_impl.1} parent=46 // loop_body
                  _
                $region52: #{forward_impl.1} parent=46 // loop_footer
                  %s196 = sadd.s32 1, %s192
                $region53: #{forward_impl.1} parent=46 // loop_footer_branch
                  %191 = sbr.rel target = $region49
                $region54: #{forward_impl.1} parent=46 // loop_exit
                  _
                loop: start=0, step=1, limit=1
                $region55: #{forward_impl.1} parent=46 // loop_pre_header
                  _
                $region56: #{forward_impl.1} parent=46 // loop_header
                  %s201 = sphi 0, %s205
                  %p202 = scmp.ge.s32.totalorder %s201, 1
                  %s206 = sphi %s157, %s157
                  %s207 = sphi %s155, %s155
                $region57: #{forward_impl.1} parent=46 // loop_header_branch
                  %204 = sbr.rel (%p202) target = $region61
                $region58: #{forward_impl.1} parent=46 // loop_body
                  %v208 = vld [vmem:[%s206] sm:$0xf]
                  %209 = vst [vmem:[%s207] sm:$0xf] %v208
                  %v210 = vld [vmem:[%s206 + $0x10] sm:$0xf]
                  %211 = vst [vmem:[%s207 + $0x4] sm:$0xf] %v210
                  %v212 = vld [vmem:[%s206 + $0x20] sm:$0xf]
                  %213 = vst [vmem:[%s207 + $0x8] sm:$0xf] %v212
                  %v214 = vld [vmem:[%s206 + $0x30] sm:$0xf]
                  %215 = vst [vmem:[%s207 + $0xc] sm:$0xf] %v214
                  %v216 = vld [vmem:[%s206 + $0x40] sm:$0xf]
                  %217 = vst [vmem:[%s207 + $0x10] sm:$0xf] %v216
                  %v218 = vld [vmem:[%s206 + $0x50] sm:$0xf]
                  %219 = vst [vmem:[%s207 + $0x14] sm:$0xf] %v218
                  %v220 = vld [vmem:[%s206 + $0x60] sm:$0xf]
                  %221 = vst [vmem:[%s207 + $0x18] sm:$0xf] %v220
                  %v222 = vld [vmem:[%s206 + $0x70] sm:$0xf]
                  %223 = vst [vmem:[%s207 + $0x1c] sm:$0xf] %v222
                $region59: #{forward_impl.1} parent=46 // loop_footer
                  %s205 = sadd.s32 1, %s201
                $region60: #{forward_impl.1} parent=46 // loop_footer_branch
                  %200 = sbr.rel target = $region56
                $region61: #{forward_impl.1} parent=46 // loop_exit
                  _
              $region47: #{forward_impl.1} parent=31 // pred_fallthru
                _
            $region32: #{forward_impl.1} parent=27 // pred_fallthru
              _
            // Predicated region
            $region33: #{forward_impl.1} parent=27 // pred_check
              _
            $region34: #{forward_impl.1} parent=27 // pred_check_branch
              %163 = sbr.rel (0) target = $region36
            $region35: #{forward_impl.1} parent=27 // pred_region
              loop: start=0, step=1, limit=1
              $region37: #{forward_impl.1} parent=35 // loop_pre_header
                _
              $region38: #{forward_impl.1} parent=35 // loop_header
                %s166 = sphi 0, %s170
                %p167 = scmp.ge.s32.totalorder %s166, 1
                %s171 = sphi %s157, %s157
                %s172 = sphi %s155, %s155
              $region39: #{forward_impl.1} parent=35 // loop_header_branch
                %169 = sbr.rel (%p167) target = $region43
              $region40: #{forward_impl.1} parent=35 // loop_body
                %v173 = vld [vmem:[%s171] sm:$0xf]
                %174 = vst [vmem:[%s172] sm:$0xf] %v173
                %v175 = vld [vmem:[%s171 + $0x10] sm:$0xf]
                %176 = vst [vmem:[%s172 + $0x4] sm:$0xf] %v175
                %v177 = vld [vmem:[%s171 + $0x20] sm:$0xf]
                %178 = vst [vmem:[%s172 + $0x8] sm:$0xf] %v177
                %v179 = vld [vmem:[%s171 + $0x30] sm:$0xf]
                %180 = vst [vmem:[%s172 + $0xc] sm:$0xf] %v179
                %v181 = vld [vmem:[%s171 + $0x40] sm:$0xf]
                %182 = vst [vmem:[%s172 + $0x10] sm:$0xf] %v181
                %v183 = vld [vmem:[%s171 + $0x50] sm:$0xf]
                %184 = vst [vmem:[%s172 + $0x14] sm:$0xf] %v183
                %v185 = vld [vmem:[%s171 + $0x60] sm:$0xf]
                %186 = vst [vmem:[%s172 + $0x18] sm:$0xf] %v185
                %v187 = vld [vmem:[%s171 + $0x70] sm:$0xf]
                %188 = vst [vmem:[%s172 + $0x1c] sm:$0xf] %v187
              $region41: #{forward_impl.1} parent=35 // loop_footer
                %s170 = sadd.s32 1, %s166
              $region42: #{forward_impl.1} parent=35 // loop_footer_branch
                %165 = sbr.rel target = $region38
              $region43: #{forward_impl.1} parent=35 // loop_exit
                _
            $region36: #{forward_impl.1} parent=27 // pred_fallthru
              _
          $region28: #{forward_impl.1} parent=23 // pred_fallthru
            _
          %224 = vnop
        $region24: #{forward_impl.1} parent=19 // pred_fallthru
          _
        // Predicated region
        $region62: #{forward_impl.1} parent=19 // pred_check
          %p225 = pneg %p95
        $region63: #{forward_impl.1} parent=19 // pred_check_branch
          %227 = sbr.rel (%p225) target = $region65
        $region64: #{forward_impl.1} parent=19 // pred_region
          %p228 = scmp.lt.s32.totalorder %s24, 3
          %s229 = scalar_select %p228, %s24, 3
          %s230 = scalar_lea.vmem %s3, %s229
        $region65: #{forward_impl.1} parent=19 // pred_fallthru
          _
      $region20: #{forward_impl.1} parent=5 // pred_fallthru
        _
      %p231 = scmp.le.s32.totalorder 1, %s16
      %p232 = scmp.lt.s32.totalorder %s16, 5
      %p233 = pnand %p231, %p232
      %p234 = pneg %p233
      // Predicated region
      $region66: #{forward_impl.1} parent=5 // pred_check
        _
      $region67: #{forward_impl.1} parent=5 // pred_check_branch
        %236 = sbr.rel (%p233) target = $region69
      $region68: #{forward_impl.1} parent=5 // pred_region
        %s237 = ssub.s32 %s16, 1
        %s238 = sand.u32 %s62, 1
        %s239 = sand.u32 %s62, 1
        %s240 = smul.addr %s239, 32
        %s241 = scalar_lea.vmem [#allocation7], %s240
        // Predicated region
        $region70: #{forward_impl.1} parent=68 // pred_check
          %p242 = pneg %p75
        $region71: #{forward_impl.1} parent=68 // pred_check_branch
          %244 = sbr.rel (%p242) target = $region73
        $region72: #{forward_impl.1} parent=68 // pred_region
          _
        $region73: #{forward_impl.1} parent=68 // pred_fallthru
          _
        %p245 = pneg %p49
        %p246 = pneg %p46
        %s247 = sand.u32 %s62, 1
        %s248 = sand.u32 %s62, 1
        %s249 = smul.addr %s248, 32
        %s250 = scalar_lea.vmem [#allocation7], %s249
        %p251 = pneg %p75
        %p252 = pneg %p72
        %p253 = scmp.lt.s32.totalorder %s26, 3
        %s254 = scalar_select %p253, %s26, 3
        %s255 = scalar_lea.vmem %s3, %s254
        %p256 = pneg %p101
        %p257 = pneg %p98
        %p258 = pneg %p127
        %p259 = pneg %p124
        %s260 = smul.u32 4, %s25
        %p261 = scmp.lt.s32.totalorder %s260, 3
        %s262 = scalar_select %p261, %s260, 3
        %s263 = smul.addr %s262, 16
        %s264 = smul.addr %s263, 8
        %s265 = scalar_lea.vmem %s4, %s264
        %p266 = scmp.lt.s32.totalorder %s26, 3
        %s267 = scalar_select %p266, %s26, 3
        %s268 = scalar_lea.vmem %s3, %s267
        %s269 = smul.u32 4, %s25
        %p270 = scmp.lt.s32.totalorder %s269, 3
        %s271 = scalar_select %p270, %s269, 3
        %s272 = smul.addr %s271, 16
        %s273 = smul.addr %s272, 8
        %s274 = scalar_lea.vmem %s4, %s273
        %s275 = smul.u32 4, %s25
        %p277 = scmp.eq.s32.totalorder %s26, 0
        // Predicated region
        $region74: #{forward_impl.1} parent=68 // pred_check
          %p278 = pneg %p277
        $region75: #{forward_impl.1} parent=68 // pred_check_branch
          %280 = sbr.rel (%p278) target = $region77
        $region76: #{forward_impl.1} parent=68 // pred_region
          %vm281 = vcmask 7168
          %282 = vst.msk [vmem:[#allocation3] sm:$0xff] %vm281, -inf
          %283 = vst.msk [vmem:[#allocation3 + $0x8] sm:$0xff] %vm281, -inf
          %284 = vst.msk [vmem:[#allocation3 + $0x10] sm:$0xff] %vm281, -inf
          %285 = vst.msk [vmem:[#allocation3 + $0x18] sm:$0xff] %vm281, -inf
          %286 = vst.msk [vmem:[#allocation3 + $0x20] sm:$0xff] %vm281, -inf
          %287 = vst.msk [vmem:[#allocation3 + $0x28] sm:$0xff] %vm281, -inf
          %288 = vst.msk [vmem:[#allocation3 + $0x30] sm:$0xff] %vm281, -inf
          %289 = vst.msk [vmem:[#allocation3 + $0x38] sm:$0xff] %vm281, -inf
          %290 = vst.msk [vmem:[#allocation3 + $0x40] sm:$0xff] %vm281, -inf
          %291 = vst.msk [vmem:[#allocation3 + $0x48] sm:$0xff] %vm281, -inf
          %292 = vst.msk [vmem:[#allocation3 + $0x50] sm:$0xff] %vm281, -inf
          %293 = vst.msk [vmem:[#allocation3 + $0x58] sm:$0xff] %vm281, -inf
          %294 = vst.msk [vmem:[#allocation3 + $0x60] sm:$0xff] %vm281, -inf
          %295 = vst.msk [vmem:[#allocation3 + $0x68] sm:$0xff] %vm281, -inf
          %296 = vst.msk [vmem:[#allocation3 + $0x70] sm:$0xff] %vm281, -inf
          %297 = vst.msk [vmem:[#allocation3 + $0x78] sm:$0xff] %vm281, -inf
          %298 = vst.msk [vmem:[#allocation4] sm:$0xff] %vm281, 0.0
          %299 = vst.msk [vmem:[#allocation4 + $0x8] sm:$0xff] %vm281, 0.0
          %300 = vst.msk [vmem:[#allocation4 + $0x10] sm:$0xff] %vm281, 0.0
          %301 = vst.msk [vmem:[#allocation4 + $0x18] sm:$0xff] %vm281, 0.0
          %302 = vst.msk [vmem:[#allocation4 + $0x20] sm:$0xff] %vm281, 0.0
          %303 = vst.msk [vmem:[#allocation4 + $0x28] sm:$0xff] %vm281, 0.0
          %304 = vst.msk [vmem:[#allocation4 + $0x30] sm:$0xff] %vm281, 0.0
          %305 = vst.msk [vmem:[#allocation4 + $0x38] sm:$0xff] %vm281, 0.0
          %306 = vst.msk [vmem:[#allocation4 + $0x40] sm:$0xff] %vm281, 0.0
          %307 = vst.msk [vmem:[#allocation4 + $0x48] sm:$0xff] %vm281, 0.0
          %308 = vst.msk [vmem:[#allocation4 + $0x50] sm:$0xff] %vm281, 0.0
          %309 = vst.msk [vmem:[#allocation4 + $0x58] sm:$0xff] %vm281, 0.0
          %310 = vst.msk [vmem:[#allocation4 + $0x60] sm:$0xff] %vm281, 0.0
          %311 = vst.msk [vmem:[#allocation4 + $0x68] sm:$0xff] %vm281, 0.0
          %312 = vst.msk [vmem:[#allocation4 + $0x70] sm:$0xff] %vm281, 0.0
          %313 = vst.msk [vmem:[#allocation4 + $0x78] sm:$0xff] %vm281, 0.0
          %s314 = smul.u32 %s25, 1024
          loop: start=0, step=1, limit=128
          $region78: #{forward_impl.1} parent=76 // loop_pre_header
            _
          $region79: #{forward_impl.1} parent=76 // loop_header
            %s316 = sphi 0, %s320
            %p317 = scmp.ge.s32.totalorder %s316, 128
          $region80: #{forward_impl.1} parent=76 // loop_header_branch
            %319 = sbr.rel (%p317) target = $region84
          $region81: #{forward_impl.1} parent=76 // loop_body
            %s321 = smul.u32 %s316, 8
            %s322 = sadd.s32 %s314, %s321
            %s323 = sld [smem:[#allocation6 + %s322]]
            %s324 = scalar_lea.vmem %s1, %s323
            %v325 = vld [vmem:[%s324] sm:$0x1]
            %v326 = vadd.f32 %v325, 0.0
            %s327 = sadd.s32 %s322, 1
            %s328 = sld [smem:[#allocation6 + %s327]]
            %s329 = scalar_lea.vmem %s1, %s328
            %v330 = vld [vmem:[%s329] sm:$0x1]
            %v331 = vadd.f32 %v326, %v330
            %s332 = sadd.s32 %s322, 2
            %s333 = sld [smem:[#allocation6 + %s332]]
            %s334 = scalar_lea.vmem %s1, %s333
            %v335 = vld [vmem:[%s334] sm:$0x1]
            %v336 = vadd.f32 %v331, %v335
            %s337 = sadd.s32 %s322, 3
            %s338 = sld [smem:[#allocation6 + %s337]]
            %s339 = scalar_lea.vmem %s1, %s338
            %v340 = vld [vmem:[%s339] sm:$0x1]
            %v341 = vadd.f32 %v336, %v340
            %s342 = sadd.s32 %s322, 4
            %s343 = sld [smem:[#allocation6 + %s342]]
            %s344 = scalar_lea.vmem %s1, %s343
            %v345 = vld [vmem:[%s344] sm:$0x1]
            %v346 = vadd.f32 %v341, %v345
            %s347 = sadd.s32 %s322, 5
            %s348 = sld [smem:[#allocation6 + %s347]]
            %s349 = scalar_lea.vmem %s1, %s348
            %v350 = vld [vmem:[%s349] sm:$0x1]
            %v351 = vadd.f32 %v346, %v350
            %s352 = sadd.s32 %s322, 6
            %s353 = sld [smem:[#allocation6 + %s352]]
            %s354 = scalar_lea.vmem %s1, %s353
            %v355 = vld [vmem:[%s354] sm:$0x1]
            %v356 = vadd.f32 %v351, %v355
            %s357 = sadd.s32 %s322, 7
            %s358 = sld [smem:[#allocation6 + %s357]]
            %s359 = scalar_lea.vmem %s1, %s358
            %v360 = vld [vmem:[%s359] sm:$0x1]
            %v361 = vadd.f32 %v356, %v360
            %v362 = vmul.f32 %v361, 0.125
            %s363 = scalar_lea.vmem [#allocation2], %s316
            %vm364 = vcmask 516096
            %365 = vst.msk [vmem:[%s363] sm:$0x1] %vm364, %v362
          $region82: #{forward_impl.1} parent=76 // loop_footer
            %s320 = sadd.s32 1, %s316
          $region83: #{forward_impl.1} parent=76 // loop_footer_branch
            %315 = sbr.rel target = $region79
          $region84: #{forward_impl.1} parent=76 // loop_exit
            _
        $region77: #{forward_impl.1} parent=68 // pred_fallthru
          _
        %v366 = vld [vmem:[#allocation2] sm:$0xff]
        %v367 = vld [vmem:[#allocation2 + $0x8] sm:$0xff]
        %v368 = vld [vmem:[#allocation2 + $0x10] sm:$0xff]
        %v369 = vld [vmem:[#allocation2 + $0x18] sm:$0xff]
        %v370 = vld [vmem:[#allocation2 + $0x20] sm:$0xff]
        %v371 = vld [vmem:[#allocation2 + $0x28] sm:$0xff]
        %v372 = vld [vmem:[#allocation2 + $0x30] sm:$0xff]
        %v373 = vld [vmem:[#allocation2 + $0x38] sm:$0xff]
        %v374 = vld [vmem:[#allocation2 + $0x40] sm:$0xff]
        %v375 = vld [vmem:[#allocation2 + $0x48] sm:$0xff]
        %v376 = vld [vmem:[#allocation2 + $0x50] sm:$0xff]
        %v377 = vld [vmem:[#allocation2 + $0x58] sm:$0xff]
        %v378 = vld [vmem:[#allocation2 + $0x60] sm:$0xff]
        %v379 = vld [vmem:[#allocation2 + $0x68] sm:$0xff]
        %v380 = vld [vmem:[#allocation2 + $0x70] sm:$0xff]
        %v381 = vld [vmem:[#allocation2 + $0x78] sm:$0xff]
        %v382 = vpack.c.bf16 %v367, %v366
        %v383 = vpack.c.bf16 %v369, %v368
        %v384 = vpack.c.bf16 %v371, %v370
        %v385 = vpack.c.bf16 %v373, %v372
        %v386 = vpack.c.bf16 %v375, %v374
        %v387 = vpack.c.bf16 %v377, %v376
        %v388 = vpack.c.bf16 %v379, %v378
        %v389 = vpack.c.bf16 %v381, %v380
        %v390 = vld [vmem:[%s241] sm:$0xf]
        %v391 = vld [vmem:[%s241 + $0x4] sm:$0xf]
        %v392 = vld [vmem:[%s241 + $0x8] sm:$0xf]
        %v393 = vld [vmem:[%s241 + $0xc] sm:$0xf]
        %v394 = vld [vmem:[%s241 + $0x10] sm:$0xf]
        %v395 = vld [vmem:[%s241 + $0x14] sm:$0xf]
        %v396 = vld [vmem:[%s241 + $0x18] sm:$0xf]
        %v397 = vld [vmem:[%s241 + $0x1c] sm:$0xf]
        %v398 = vld [vmem:[%s268] sm:$0x1]
        %v400 = vlaneseq
        %v401 = vshrl.u32 %v400, 7
        %v402 = vsub.s32 0, %v401
        %v403 = vrot.slane %v398, %v402
        %v413 = vunpack.c.l.b16 %v390
        %v414 = vunpack.c.l.b16 %v391
        %v415 = vunpack.c.l.b16 %v392
        %v416 = vunpack.c.l.b16 %v393
        %v417 = vunpack.c.l.b16 %v394
        %v418 = vunpack.c.l.b16 %v395
        %v419 = vunpack.c.l.b16 %v396
        %v420 = vunpack.c.l.b16 %v397
        %v421 = vpack.c.b16 %v414, %v413
        %v422 = vpack.c.b16 %v416, %v415
        %v423 = vpack.c.b16 %v418, %v417
        %v424 = vpack.c.b16 %v420, %v419
        %vm429 = vcmask 523264
        %v431 = vsel %vm429, %v382, 0
        %v434 = vsel %vm429, %v383, 0
        %v437 = vsel %vm429, %v384, 0
        %v440 = vsel %vm429, %v385, 0
        %v443 = vsel %vm429, %v386, 0
        %v446 = vsel %vm429, %v387, 0
        %v449 = vsel %vm429, %v388, 0
        %v452 = vsel %vm429, %v389, 0
        %454 = vmatprep.subr.bf16.mxu0 0
        %455 = vmatpush1.bf16.msra.mxu0 %v421
        %456 = vmatprep.subr.bf16.mxu0 0
        %457 = vmatpush1.bf16.msra.mxu0 %v422
        %458 = vmatprep.subr.bf16.mxu0 0
        %459 = vmatpush1.bf16.msra.mxu0 %v423
        %460 = vmatprep.subr.bf16.mxu0 0
        %461 = vmatpush1.bf16.msra.mxu0 %v424
        %462 = vmatprep.subr.bf16.mxu0 0
        %463 = vmatpush1.bf16.msra.mxu0 0
        %464 = vmatprep.subr.bf16.mxu0 0
        %465 = vmatpush1.bf16.msra.mxu0 0
        %466 = vmatprep.subr.bf16.mxu0 0
        %467 = vmatpush1.bf16.msra.mxu0 0
        %468 = vmatprep.subr.bf16.mxu0 0
        %469 = vmatpush1.bf16.msra.mxu0 0
        %470 = vmatprep.subr.bf16.mxu0 0
        %471 = vmatpush1.bf16.msra.mxu0 0
        %472 = vmatprep.subr.bf16.mxu0 0
        %473 = vmatpush1.bf16.msra.mxu0 0
        %474 = vmatprep.subr.bf16.mxu0 0
        %475 = vmatpush1.bf16.msra.mxu0 0
        %476 = vmatprep.subr.bf16.mxu0 0
        %477 = vmatpush1.bf16.msra.mxu0 0
        %478 = vmatprep.subr.bf16.mxu0 0
        %479 = vmatpush1.bf16.msra.mxu0 0
        %480 = vmatprep.subr.bf16.mxu0 0
        %481 = vmatpush1.bf16.msra.mxu0 0
        %482 = vmatprep.subr.bf16.mxu0 0
        %483 = vmatpush1.bf16.msra.mxu0 0
        %484 = vmatprep.subr.bf16.mxu0 0
        %485 = vmatpush1.bf16.msra.mxu0 0
        %486 = vmatprep.mubr.bf16.mxu0 0
        %487 = vmatmul.mubr.bf16.gmra.mrb[0].mxu0 %v431
        %v488 = vpop.f32.mrb[0].mxu0
        %v489 = vadd.f32 %v403, %v488
        %v490 = vpop.f32.mrb[0].mxu0
        %v491 = vpop.f32.mrb[0].mxu0
        %v492 = vadd.f32 %v403, %v491
        %v493 = vpop.f32.mrb[0].mxu0
        %494 = vmatprep.mubr.bf16.mxu0 0
        %495 = vmatmul.mubr.bf16.gmra.mrb[0].mxu0 %v434
        %v496 = vpop.f32.mrb[0].mxu0
        %v497 = vadd.f32 %v403, %v496
        %v498 = vpop.f32.mrb[0].mxu0
        %v499 = vpop.f32.mrb[0].mxu0
        %v500 = vadd.f32 %v403, %v499
        %v501 = vpop.f32.mrb[0].mxu0
        %502 = vmatprep.mubr.bf16.mxu0 0
        %503 = vmatmul.mubr.bf16.gmra.mrb[0].mxu0 %v437
        %v504 = vpop.f32.mrb[0].mxu0
        %v505 = vadd.f32 %v403, %v504
        %v506 = vpop.f32.mrb[0].mxu0
        %v507 = vpop.f32.mrb[0].mxu0
        %v508 = vadd.f32 %v403, %v507
        %v509 = vpop.f32.mrb[0].mxu0
        %510 = vmatprep.mubr.bf16.mxu0 0
        %511 = vmatmul.mubr.bf16.gmra.mrb[0].mxu0 %v440
        %v512 = vpop.f32.mrb[0].mxu0
        %v513 = vadd.f32 %v403, %v512
        %v514 = vpop.f32.mrb[0].mxu0
        %v515 = vpop.f32.mrb[0].mxu0
        %v516 = vadd.f32 %v403, %v515
        %v517 = vpop.f32.mrb[0].mxu0
        %518 = vmatprep.mubr.bf16.mxu0 0
        %519 = vmatmul.mubr.bf16.gmra.mrb[0].mxu0 %v443
        %v520 = vpop.f32.mrb[0].mxu0
        %v521 = vadd.f32 %v403, %v520
        %v522 = vpop.f32.mrb[0].mxu0
        %v523 = vpop.f32.mrb[0].mxu0
        %v524 = vadd.f32 %v403, %v523
        %v525 = vpop.f32.mrb[0].mxu0
        %526 = vmatprep.mubr.bf16.mxu0 0
        %527 = vmatmul.mubr.bf16.gmra.mrb[0].mxu0 %v446
        %v528 = vpop.f32.mrb[0].mxu0
        %v529 = vadd.f32 %v403, %v528
        %v530 = vpop.f32.mrb[0].mxu0
        %v531 = vpop.f32.mrb[0].mxu0
        %v532 = vadd.f32 %v403, %v531
        %v533 = vpop.f32.mrb[0].mxu0
        %534 = vmatprep.mubr.bf16.mxu0 0
        %535 = vmatmul.mubr.bf16.gmra.mrb[0].mxu0 %v449
        %v536 = vpop.f32.mrb[0].mxu0
        %v537 = vadd.f32 %v403, %v536
        %v538 = vpop.f32.mrb[0].mxu0
        %v539 = vpop.f32.mrb[0].mxu0
        %v540 = vadd.f32 %v403, %v539
        %v541 = vpop.f32.mrb[0].mxu0
        %542 = vmatprep.mubr.bf16.mxu0 0
        %543 = vmatmul.mubr.bf16.gmra.mrb[0].mxu0 %v452
        %v544 = vpop.f32.mrb[0].mxu0
        %v545 = vadd.f32 %v403, %v544
        %v546 = vpop.f32.mrb[0].mxu0
        %v547 = vpop.f32.mrb[0].mxu0
        %v548 = vadd.f32 %v403, %v547
        %v549 = vpop.f32.mrb[0].mxu0
        %550 = vdwg.mxu0
        %v551 = vld [vmem:[#allocation3] sm:$0xff]
        %v552 = vld [vmem:[#allocation3 + $0x8] sm:$0xff]
        %v553 = vld [vmem:[#allocation3 + $0x10] sm:$0xff]
        %v554 = vld [vmem:[#allocation3 + $0x18] sm:$0xff]
        %v555 = vld [vmem:[#allocation3 + $0x20] sm:$0xff]
        %v556 = vld [vmem:[#allocation3 + $0x28] sm:$0xff]
        %v557 = vld [vmem:[#allocation3 + $0x30] sm:$0xff]
        %v558 = vld [vmem:[#allocation3 + $0x38] sm:$0xff]
        %v559 = vld [vmem:[#allocation3 + $0x40] sm:$0xff]
        %v560 = vld [vmem:[#allocation3 + $0x48] sm:$0xff]
        %v561 = vld [vmem:[#allocation3 + $0x50] sm:$0xff]
        %v562 = vld [vmem:[#allocation3 + $0x58] sm:$0xff]
        %v563 = vld [vmem:[#allocation3 + $0x60] sm:$0xff]
        %v564 = vld [vmem:[#allocation3 + $0x68] sm:$0xff]
        %v565 = vld [vmem:[#allocation3 + $0x70] sm:$0xff]
        %v566 = vld [vmem:[#allocation3 + $0x78] sm:$0xff]
        %567 = vmax.xlane.f32.xlu0 %v489
        %v568 = vpop.xlane.xlu0 %567
        %569 = vmax.xlane.f32.xlu0 %v492
        %v570 = vpop.xlane.xlu0 %569
        %571 = vmax.xlane.f32.xlu0 %v497
        %v572 = vpop.xlane.xlu0 %571
        %573 = vmax.xlane.f32.xlu0 %v500
        %v574 = vpop.xlane.xlu0 %573
        %575 = vmax.xlane.f32.xlu0 %v505
        %v576 = vpop.xlane.xlu0 %575
        %577 = vmax.xlane.f32.xlu0 %v508
        %v578 = vpop.xlane.xlu0 %577
        %579 = vmax.xlane.f32.xlu0 %v513
        %v580 = vpop.xlane.xlu0 %579
        %581 = vmax.xlane.f32.xlu0 %v516
        %v582 = vpop.xlane.xlu0 %581
        %583 = vmax.xlane.f32.xlu0 %v521
        %v584 = vpop.xlane.xlu0 %583
        %585 = vmax.xlane.f32.xlu0 %v524
        %v586 = vpop.xlane.xlu0 %585
        %587 = vmax.xlane.f32.xlu0 %v529
        %v588 = vpop.xlane.xlu0 %587
        %589 = vmax.xlane.f32.xlu0 %v532
        %v590 = vpop.xlane.xlu0 %589
        %591 = vmax.xlane.f32.xlu0 %v537
        %v592 = vpop.xlane.xlu0 %591
        %593 = vmax.xlane.f32.xlu0 %v540
        %v594 = vpop.xlane.xlu0 %593
        %595 = vmax.xlane.f32.xlu0 %v545
        %v596 = vpop.xlane.xlu0 %595
        %597 = vmax.xlane.f32.xlu0 %v548
        %v598 = vpop.xlane.xlu0 %597
        %v599 = vmax.f32 %v551, %v568
        %v600 = vmax.f32 %v552, %v570
        %v601 = vmax.f32 %v553, %v572
        %v602 = vmax.f32 %v554, %v574
        %v603 = vmax.f32 %v555, %v576
        %v604 = vmax.f32 %v556, %v578
        %v605 = vmax.f32 %v557, %v580
        %v606 = vmax.f32 %v558, %v582
        %v607 = vmax.f32 %v559, %v584
        %v608 = vmax.f32 %v560, %v586
        %v609 = vmax.f32 %v561, %v588
        %v610 = vmax.f32 %v562, %v590
        %v611 = vmax.f32 %v563, %v592
        %v612 = vmax.f32 %v564, %v594
        %v613 = vmax.f32 %v565, %v596
        %v614 = vmax.f32 %v566, %v598
        %v615 = vld [vmem:[#allocation4] sm:$0xff]
        %v616 = vld [vmem:[#allocation4 + $0x8] sm:$0xff]
        %v617 = vld [vmem:[#allocation4 + $0x10] sm:$0xff]
        %v618 = vld [vmem:[#allocation4 + $0x18] sm:$0xff]
        %v619 = vld [vmem:[#allocation4 + $0x20] sm:$0xff]
        %v620 = vld [vmem:[#allocation4 + $0x28] sm:$0xff]
        %v621 = vld [vmem:[#allocation4 + $0x30] sm:$0xff]
        %v622 = vld [vmem:[#allocation4 + $0x38] sm:$0xff]
        %v623 = vld [vmem:[#allocation4 + $0x40] sm:$0xff]
        %v624 = vld [vmem:[#allocation4 + $0x48] sm:$0xff]
        %v625 = vld [vmem:[#allocation4 + $0x50] sm:$0xff]
        %v626 = vld [vmem:[#allocation4 + $0x58] sm:$0xff]
        %v627 = vld [vmem:[#allocation4 + $0x60] sm:$0xff]
        %v628 = vld [vmem:[#allocation4 + $0x68] sm:$0xff]
        %v629 = vld [vmem:[#allocation4 + $0x70] sm:$0xff]
        %v630 = vld [vmem:[#allocation4 + $0x78] sm:$0xff]
        %v631 = vsub.f32 %v551, %v599
        %v632 = vsub.f32 %v552, %v600
        %v633 = vsub.f32 %v553, %v601
        %v634 = vsub.f32 %v554, %v602
        %v635 = vsub.f32 %v555, %v603
        %v636 = vsub.f32 %v556, %v604
        %v637 = vsub.f32 %v557, %v605
        %v638 = vsub.f32 %v558, %v606
        %v639 = vsub.f32 %v559, %v607
        %v640 = vsub.f32 %v560, %v608
        %v641 = vsub.f32 %v561, %v609
        %v642 = vsub.f32 %v562, %v610
        %v643 = vsub.f32 %v563, %v611
        %v644 = vsub.f32 %v564, %v612
        %v645 = vsub.f32 %v565, %v613
        %v646 = vsub.f32 %v566, %v614
        %v647 = vmul.f32 %v631, 1.442695
        %v648 = vpow.pop %v647
        %v649 = vmul.f32 %v632, 1.442695
        %v650 = vpow.pop %v649
        %v651 = vmul.f32 %v633, 1.442695
        %v652 = vpow.pop %v651
        %v653 = vmul.f32 %v634, 1.442695
        %v654 = vpow.pop %v653
        %v655 = vmul.f32 %v635, 1.442695
        %v656 = vpow.pop %v655
        %v657 = vmul.f32 %v636, 1.442695
        %v658 = vpow.pop %v657
        %v659 = vmul.f32 %v637, 1.442695
        %v660 = vpow.pop %v659
        %v661 = vmul.f32 %v638, 1.442695
        %v662 = vpow.pop %v661
        %v663 = vmul.f32 %v639, 1.442695
        %v664 = vpow.pop %v663
        %v665 = vmul.f32 %v640, 1.442695
        %v666 = vpow.pop %v665
        %v667 = vmul.f32 %v641, 1.442695
        %v668 = vpow.pop %v667
        %v669 = vmul.f32 %v642, 1.442695
        %v670 = vpow.pop %v669
        %v671 = vmul.f32 %v643, 1.442695
        %v672 = vpow.pop %v671
        %v673 = vmul.f32 %v644, 1.442695
        %v674 = vpow.pop %v673
        %v675 = vmul.f32 %v645, 1.442695
        %v676 = vpow.pop %v675
        %v677 = vmul.f32 %v646, 1.442695
        %v678 = vpow.pop %v677
        %v679 = vmul.f32 %v615, %v648
        %v680 = vmul.f32 %v616, %v650
        %v681 = vmul.f32 %v617, %v652
        %v682 = vmul.f32 %v618, %v654
        %v683 = vmul.f32 %v619, %v656
        %v684 = vmul.f32 %v620, %v658
        %v685 = vmul.f32 %v621, %v660
        %v686 = vmul.f32 %v622, %v662
        %v687 = vmul.f32 %v623, %v664
        %v688 = vmul.f32 %v624, %v666
        %v689 = vmul.f32 %v625, %v668
        %v690 = vmul.f32 %v626, %v670
        %v691 = vmul.f32 %v627, %v672
        %v692 = vmul.f32 %v628, %v674
        %v693 = vmul.f32 %v629, %v676
        %v694 = vmul.f32 %v630, %v678
        %696 = vset.pattern.permute.xlu0 0
        %697 = vperm.xlu0 %696, %v599
        %v698 = vpop.permute.xlu0 %697
        %701 = vset.pattern.permute.xlu0 0
        %702 = vperm.xlu0 %701, %v600
        %v703 = vpop.permute.xlu0 %702
        %706 = vset.pattern.permute.xlu0 0
        %707 = vperm.xlu0 %706, %v601
        %v708 = vpop.permute.xlu0 %707
        %711 = vset.pattern.permute.xlu0 0
        %712 = vperm.xlu0 %711, %v602
        %v713 = vpop.permute.xlu0 %712
        %716 = vset.pattern.permute.xlu0 0
        %717 = vperm.xlu0 %716, %v603
        %v718 = vpop.permute.xlu0 %717
        %721 = vset.pattern.permute.xlu0 0
        %722 = vperm.xlu0 %721, %v604
        %v723 = vpop.permute.xlu0 %722
        %726 = vset.pattern.permute.xlu0 0
        %727 = vperm.xlu0 %726, %v605
        %v728 = vpop.permute.xlu0 %727
        %731 = vset.pattern.permute.xlu0 0
        %732 = vperm.xlu0 %731, %v606
        %v733 = vpop.permute.xlu0 %732
        %736 = vset.pattern.permute.xlu0 0
        %737 = vperm.xlu0 %736, %v607
        %v738 = vpop.permute.xlu0 %737
        %741 = vset.pattern.permute.xlu0 0
        %742 = vperm.xlu0 %741, %v608
        %v743 = vpop.permute.xlu0 %742
        %746 = vset.pattern.permute.xlu0 0
        %747 = vperm.xlu0 %746, %v609
        %v748 = vpop.permute.xlu0 %747
        %751 = vset.pattern.permute.xlu0 0
        %752 = vperm.xlu0 %751, %v610
        %v753 = vpop.permute.xlu0 %752
        %756 = vset.pattern.permute.xlu0 0
        %757 = vperm.xlu0 %756, %v611
        %v758 = vpop.permute.xlu0 %757
        %761 = vset.pattern.permute.xlu0 0
        %762 = vperm.xlu0 %761, %v612
        %v763 = vpop.permute.xlu0 %762
        %766 = vset.pattern.permute.xlu0 0
        %767 = vperm.xlu0 %766, %v613
        %v768 = vpop.permute.xlu0 %767
        %771 = vset.pattern.permute.xlu0 0
        %772 = vperm.xlu0 %771, %v614
        %v773 = vpop.permute.xlu0 %772
        %v775 = vsub.f32 %v489, %v698
        %v776 = vsub.f32 %v492, %v703
        %v777 = vsub.f32 %v497, %v708
        %v778 = vsub.f32 %v500, %v713
        %v779 = vsub.f32 %v505, %v718
        %v780 = vsub.f32 %v508, %v723
        %v781 = vsub.f32 %v513, %v728
        %v782 = vsub.f32 %v516, %v733
        %v783 = vsub.f32 %v521, %v738
        %v784 = vsub.f32 %v524, %v743
        %v785 = vsub.f32 %v529, %v748
        %v786 = vsub.f32 %v532, %v753
        %v787 = vsub.f32 %v537, %v758
        %v788 = vsub.f32 %v540, %v763
        %v789 = vsub.f32 %v545, %v768
        %v790 = vsub.f32 %v548, %v773
        %v791 = vmul.f32 %v775, 1.442695
        %v792 = vpow.pop %v791
        %v793 = vmul.f32 %v776, 1.442695
        %v794 = vpow.pop %v793
        %v795 = vmul.f32 %v777, 1.442695
        %v796 = vpow.pop %v795
        %v797 = vmul.f32 %v778, 1.442695
        %v798 = vpow.pop %v797
        %v799 = vmul.f32 %v779, 1.442695
        %v800 = vpow.pop %v799
        %v801 = vmul.f32 %v780, 1.442695
        %v802 = vpow.pop %v801
        %v803 = vmul.f32 %v781, 1.442695
        %v804 = vpow.pop %v803
        %v805 = vmul.f32 %v782, 1.442695
        %v806 = vpow.pop %v805
        %v807 = vmul.f32 %v783, 1.442695
        %v808 = vpow.pop %v807
        %v809 = vmul.f32 %v784, 1.442695
        %v810 = vpow.pop %v809
        %v811 = vmul.f32 %v785, 1.442695
        %v812 = vpow.pop %v811
        %v813 = vmul.f32 %v786, 1.442695
        %v814 = vpow.pop %v813
        %v815 = vmul.f32 %v787, 1.442695
        %v816 = vpow.pop %v815
        %v817 = vmul.f32 %v788, 1.442695
        %v818 = vpow.pop %v817
        %v819 = vmul.f32 %v789, 1.442695
        %v820 = vpow.pop %v819
        %v821 = vmul.f32 %v790, 1.442695
        %v822 = vpow.pop %v821
        %823 = vadd.xlane.f32.xlu0 %v792
        %v824 = vpop.xlane.xlu0 %823
        %825 = vadd.xlane.f32.xlu0 %v794
        %v826 = vpop.xlane.xlu0 %825
        %827 = vadd.xlane.f32.xlu0 %v796
        %v828 = vpop.xlane.xlu0 %827
        %829 = vadd.xlane.f32.xlu0 %v798
        %v830 = vpop.xlane.xlu0 %829
        %831 = vadd.xlane.f32.xlu0 %v800
        %v832 = vpop.xlane.xlu0 %831
        %833 = vadd.xlane.f32.xlu0 %v802
        %v834 = vpop.xlane.xlu0 %833
        %835 = vadd.xlane.f32.xlu0 %v804
        %v836 = vpop.xlane.xlu0 %835
        %837 = vadd.xlane.f32.xlu0 %v806
        %v838 = vpop.xlane.xlu0 %837
        %839 = vadd.xlane.f32.xlu0 %v808
        %v840 = vpop.xlane.xlu0 %839
        %841 = vadd.xlane.f32.xlu0 %v810
        %v842 = vpop.xlane.xlu0 %841
        %843 = vadd.xlane.f32.xlu0 %v812
        %v844 = vpop.xlane.xlu0 %843
        %845 = vadd.xlane.f32.xlu0 %v814
        %v846 = vpop.xlane.xlu0 %845
        %847 = vadd.xlane.f32.xlu0 %v816
        %v848 = vpop.xlane.xlu0 %847
        %849 = vadd.xlane.f32.xlu0 %v818
        %v850 = vpop.xlane.xlu0 %849
        %851 = vadd.xlane.f32.xlu0 %v820
        %v852 = vpop.xlane.xlu0 %851
        %853 = vadd.xlane.f32.xlu0 %v822
        %v854 = vpop.xlane.xlu0 %853
        %v855 = vadd.f32 %v679, %v824
        %v856 = vadd.f32 %v680, %v826
        %v857 = vadd.f32 %v681, %v828
        %v858 = vadd.f32 %v682, %v830
        %v859 = vadd.f32 %v683, %v832
        %v860 = vadd.f32 %v684, %v834
        %v861 = vadd.f32 %v685, %v836
        %v862 = vadd.f32 %v686, %v838
        %v863 = vadd.f32 %v687, %v840
        %v864 = vadd.f32 %v688, %v842
        %v865 = vadd.f32 %v689, %v844
        %v866 = vadd.f32 %v690, %v846
        %v867 = vadd.f32 %v691, %v848
        %v868 = vadd.f32 %v692, %v850
        %v869 = vadd.f32 %v693, %v852
        %v870 = vadd.f32 %v694, %v854
        %vm871 = vcmask 7168
        %872 = vst.msk [vmem:[#allocation4] sm:$0xff] %vm871, %v855
        %873 = vst.msk [vmem:[#allocation4 + $0x8] sm:$0xff] %vm871, %v856
        %874 = vst.msk [vmem:[#allocation4 + $0x10] sm:$0xff] %vm871, %v857
        %875 = vst.msk [vmem:[#allocation4 + $0x18] sm:$0xff] %vm871, %v858
        %876 = vst.msk [vmem:[#allocation4 + $0x20] sm:$0xff] %vm871, %v859
        %877 = vst.msk [vmem:[#allocation4 + $0x28] sm:$0xff] %vm871, %v860
        %878 = vst.msk [vmem:[#allocation4 + $0x30] sm:$0xff] %vm871, %v861
        %879 = vst.msk [vmem:[#allocation4 + $0x38] sm:$0xff] %vm871, %v862
        %880 = vst.msk [vmem:[#allocation4 + $0x40] sm:$0xff] %vm871, %v863
        %881 = vst.msk [vmem:[#allocation4 + $0x48] sm:$0xff] %vm871, %v864
        %882 = vst.msk [vmem:[#allocation4 + $0x50] sm:$0xff] %vm871, %v865
        %883 = vst.msk [vmem:[#allocation4 + $0x58] sm:$0xff] %vm871, %v866
        %884 = vst.msk [vmem:[#allocation4 + $0x60] sm:$0xff] %vm871, %v867
        %885 = vst.msk [vmem:[#allocation4 + $0x68] sm:$0xff] %vm871, %v868
        %886 = vst.msk [vmem:[#allocation4 + $0x70] sm:$0xff] %vm871, %v869
        %887 = vst.msk [vmem:[#allocation4 + $0x78] sm:$0xff] %vm871, %v870
        %888 = vst.msk [vmem:[#allocation3] sm:$0xff] %vm871, %v599
        %889 = vst.msk [vmem:[#allocation3 + $0x8] sm:$0xff] %vm871, %v600
        %890 = vst.msk [vmem:[#allocation3 + $0x10] sm:$0xff] %vm871, %v601
        %891 = vst.msk [vmem:[#allocation3 + $0x18] sm:$0xff] %vm871, %v602
        %892 = vst.msk [vmem:[#allocation3 + $0x20] sm:$0xff] %vm871, %v603
        %893 = vst.msk [vmem:[#allocation3 + $0x28] sm:$0xff] %vm871, %v604
        %894 = vst.msk [vmem:[#allocation3 + $0x30] sm:$0xff] %vm871, %v605
        %895 = vst.msk [vmem:[#allocation3 + $0x38] sm:$0xff] %vm871, %v606
        %896 = vst.msk [vmem:[#allocation3 + $0x40] sm:$0xff] %vm871, %v607
        %897 = vst.msk [vmem:[#allocation3 + $0x48] sm:$0xff] %vm871, %v608
        %898 = vst.msk [vmem:[#allocation3 + $0x50] sm:$0xff] %vm871, %v609
        %899 = vst.msk [vmem:[#allocation3 + $0x58] sm:$0xff] %vm871, %v610
        %900 = vst.msk [vmem:[#allocation3 + $0x60] sm:$0xff] %vm871, %v611
        %901 = vst.msk [vmem:[#allocation3 + $0x68] sm:$0xff] %vm871, %v612
        %902 = vst.msk [vmem:[#allocation3 + $0x70] sm:$0xff] %vm871, %v613
        %903 = vst.msk [vmem:[#allocation3 + $0x78] sm:$0xff] %vm871, %v614
        %s904 = smul.u32 %s26, 128
        %s905 = scalar_lea.vmem %s274, %s904
        %906 = vst [vmem:[%s905] sm:$0xff] %v489
        %907 = vst [vmem:[%s905 + $0x8] sm:$0xff] %v492
        %908 = vst [vmem:[%s905 + $0x10] sm:$0xff] %v497
        %909 = vst [vmem:[%s905 + $0x18] sm:$0xff] %v500
        %910 = vst [vmem:[%s905 + $0x20] sm:$0xff] %v505
        %911 = vst [vmem:[%s905 + $0x28] sm:$0xff] %v508
        %912 = vst [vmem:[%s905 + $0x30] sm:$0xff] %v513
        %913 = vst [vmem:[%s905 + $0x38] sm:$0xff] %v516
        %914 = vst [vmem:[%s905 + $0x40] sm:$0xff] %v521
        %915 = vst [vmem:[%s905 + $0x48] sm:$0xff] %v524
        %916 = vst [vmem:[%s905 + $0x50] sm:$0xff] %v529
        %917 = vst [vmem:[%s905 + $0x58] sm:$0xff] %v532
        %918 = vst [vmem:[%s905 + $0x60] sm:$0xff] %v537
        %919 = vst [vmem:[%s905 + $0x68] sm:$0xff] %v540
        %920 = vst [vmem:[%s905 + $0x70] sm:$0xff] %v545
        %921 = vst [vmem:[%s905 + $0x78] sm:$0xff] %v548
        %p922 = scmp.eq.s32.totalorder %s26, 3
        // Predicated region
        $region85: #{forward_impl.1} parent=68 // pred_check
          %p923 = pneg %p922
        $region86: #{forward_impl.1} parent=68 // pred_check_branch
          %925 = sbr.rel (%p923) target = $region88
        $region87: #{forward_impl.1} parent=68 // pred_region
          %v926 = vld [vmem:[#allocation3] sm:$0xff]
          %v927 = vld [vmem:[#allocation3 + $0x8] sm:$0xff]
          %v928 = vld [vmem:[#allocation3 + $0x10] sm:$0xff]
          %v929 = vld [vmem:[#allocation3 + $0x18] sm:$0xff]
          %v930 = vld [vmem:[#allocation3 + $0x20] sm:$0xff]
          %v931 = vld [vmem:[#allocation3 + $0x28] sm:$0xff]
          %v932 = vld [vmem:[#allocation3 + $0x30] sm:$0xff]
          %v933 = vld [vmem:[#allocation3 + $0x38] sm:$0xff]
          %v934 = vld [vmem:[#allocation3 + $0x40] sm:$0xff]
          %v935 = vld [vmem:[#allocation3 + $0x48] sm:$0xff]
          %v936 = vld [vmem:[#allocation3 + $0x50] sm:$0xff]
          %v937 = vld [vmem:[#allocation3 + $0x58] sm:$0xff]
          %v938 = vld [vmem:[#allocation3 + $0x60] sm:$0xff]
          %v939 = vld [vmem:[#allocation3 + $0x68] sm:$0xff]
          %v940 = vld [vmem:[#allocation3 + $0x70] sm:$0xff]
          %v941 = vld [vmem:[#allocation3 + $0x78] sm:$0xff]
          %v942 = vld [vmem:[#allocation4] sm:$0xff]
          %v943 = vld [vmem:[#allocation4 + $0x8] sm:$0xff]
          %v944 = vld [vmem:[#allocation4 + $0x10] sm:$0xff]
          %v945 = vld [vmem:[#allocation4 + $0x18] sm:$0xff]
          %v946 = vld [vmem:[#allocation4 + $0x20] sm:$0xff]
          %v947 = vld [vmem:[#allocation4 + $0x28] sm:$0xff]
          %v948 = vld [vmem:[#allocation4 + $0x30] sm:$0xff]
          %v949 = vld [vmem:[#allocation4 + $0x38] sm:$0xff]
          %v950 = vld [vmem:[#allocation4 + $0x40] sm:$0xff]
          %v951 = vld [vmem:[#allocation4 + $0x48] sm:$0xff]
          %v952 = vld [vmem:[#allocation4 + $0x50] sm:$0xff]
          %v953 = vld [vmem:[#allocation4 + $0x58] sm:$0xff]
          %v954 = vld [vmem:[#allocation4 + $0x60] sm:$0xff]
          %v955 = vld [vmem:[#allocation4 + $0x68] sm:$0xff]
          %v956 = vld [vmem:[#allocation4 + $0x70] sm:$0xff]
          %v957 = vld [vmem:[#allocation4 + $0x78] sm:$0xff]
          %v958 = vrcp.pop %v942
          %v959 = vmul.f32 1.0, %v958
          %v960 = vrcp.pop %v943
          %v961 = vmul.f32 1.0, %v960
          %v962 = vrcp.pop %v944
          %v963 = vmul.f32 1.0, %v962
          %v964 = vrcp.pop %v945
          %v965 = vmul.f32 1.0, %v964
          %v966 = vrcp.pop %v946
          %v967 = vmul.f32 1.0, %v966
          %v968 = vrcp.pop %v947
          %v969 = vmul.f32 1.0, %v968
          %v970 = vrcp.pop %v948
          %v971 = vmul.f32 1.0, %v970
          %v972 = vrcp.pop %v949
          %v973 = vmul.f32 1.0, %v972
          %v974 = vrcp.pop %v950
          %v975 = vmul.f32 1.0, %v974
          %v976 = vrcp.pop %v951
          %v977 = vmul.f32 1.0, %v976
          %v978 = vrcp.pop %v952
          %v979 = vmul.f32 1.0, %v978
          %v980 = vrcp.pop %v953
          %v981 = vmul.f32 1.0, %v980
          %v982 = vrcp.pop %v954
          %v983 = vmul.f32 1.0, %v982
          %v984 = vrcp.pop %v955
          %v985 = vmul.f32 1.0, %v984
          %v986 = vrcp.pop %v956
          %v987 = vmul.f32 1.0, %v986
          %v988 = vrcp.pop %v957
          %v989 = vmul.f32 1.0, %v988
          %v990 = vld [vmem:[%s274] sm:$0xff]
          %v991 = vld [vmem:[%s274 + $0x8] sm:$0xff]
          %v992 = vld [vmem:[%s274 + $0x10] sm:$0xff]
          %v993 = vld [vmem:[%s274 + $0x18] sm:$0xff]
          %v994 = vld [vmem:[%s274 + $0x20] sm:$0xff]
          %v995 = vld [vmem:[%s274 + $0x28] sm:$0xff]
          %v996 = vld [vmem:[%s274 + $0x30] sm:$0xff]
          %v997 = vld [vmem:[%s274 + $0x38] sm:$0xff]
          %v998 = vld [vmem:[%s274 + $0x40] sm:$0xff]
          %v999 = vld [vmem:[%s274 + $0x48] sm:$0xff]
          %v1000 = vld [vmem:[%s274 + $0x50] sm:$0xff]
          %v1001 = vld [vmem:[%s274 + $0x58] sm:$0xff]
          %v1002 = vld [vmem:[%s274 + $0x60] sm:$0xff]
          %v1003 = vld [vmem:[%s274 + $0x68] sm:$0xff]
          %v1004 = vld [vmem:[%s274 + $0x70] sm:$0xff]
          %v1005 = vld [vmem:[%s274 + $0x78] sm:$0xff]
          %1007 = vset.pattern.permute.xlu0 0
          %1008 = vperm.xlu0 %1007, %v926
          %v1009 = vpop.permute.xlu0 %1008
          %1012 = vset.pattern.permute.xlu0 0
          %1013 = vperm.xlu0 %1012, %v927
          %v1014 = vpop.permute.xlu0 %1013
          %1017 = vset.pattern.permute.xlu0 0
          %1018 = vperm.xlu0 %1017, %v928
          %v1019 = vpop.permute.xlu0 %1018
          %1022 = vset.pattern.permute.xlu0 0
          %1023 = vperm.xlu0 %1022, %v929
          %v1024 = vpop.permute.xlu0 %1023
          %1027 = vset.pattern.permute.xlu0 0
          %1028 = vperm.xlu0 %1027, %v930
          %v1029 = vpop.permute.xlu0 %1028
          %1032 = vset.pattern.permute.xlu0 0
          %1033 = vperm.xlu0 %1032, %v931
          %v1034 = vpop.permute.xlu0 %1033
          %1037 = vset.pattern.permute.xlu0 0
          %1038 = vperm.xlu0 %1037, %v932
          %v1039 = vpop.permute.xlu0 %1038
          %1042 = vset.pattern.permute.xlu0 0
          %1043 = vperm.xlu0 %1042, %v933
          %v1044 = vpop.permute.xlu0 %1043
          %1047 = vset.pattern.permute.xlu0 0
          %1048 = vperm.xlu0 %1047, %v934
          %v1049 = vpop.permute.xlu0 %1048
          %1052 = vset.pattern.permute.xlu0 0
          %1053 = vperm.xlu0 %1052, %v935
          %v1054 = vpop.permute.xlu0 %1053
          %1057 = vset.pattern.permute.xlu0 0
          %1058 = vperm.xlu0 %1057, %v936
          %v1059 = vpop.permute.xlu0 %1058
          %1062 = vset.pattern.permute.xlu0 0
          %1063 = vperm.xlu0 %1062, %v937
          %v1064 = vpop.permute.xlu0 %1063
          %1067 = vset.pattern.permute.xlu0 0
          %1068 = vperm.xlu0 %1067, %v938
          %v1069 = vpop.permute.xlu0 %1068
          %1072 = vset.pattern.permute.xlu0 0
          %1073 = vperm.xlu0 %1072, %v939
          %v1074 = vpop.permute.xlu0 %1073
          %1077 = vset.pattern.permute.xlu0 0
          %1078 = vperm.xlu0 %1077, %v940
          %v1079 = vpop.permute.xlu0 %1078
          %1082 = vset.pattern.permute.xlu0 0
          %1083 = vperm.xlu0 %1082, %v941
          %v1084 = vpop.permute.xlu0 %1083
          %v1086 = vsub.f32 %v990, %v1009
          %v1087 = vsub.f32 %v991, %v1014
          %v1088 = vsub.f32 %v992, %v1019
          %v1089 = vsub.f32 %v993, %v1024
          %v1090 = vsub.f32 %v994, %v1029
          %v1091 = vsub.f32 %v995, %v1034
          %v1092 = vsub.f32 %v996, %v1039
          %v1093 = vsub.f32 %v997, %v1044
          %v1094 = vsub.f32 %v998, %v1049
          %v1095 = vsub.f32 %v999, %v1054
          %v1096 = vsub.f32 %v1000, %v1059
          %v1097 = vsub.f32 %v1001, %v1064
          %v1098 = vsub.f32 %v1002, %v1069
          %v1099 = vsub.f32 %v1003, %v1074
          %v1100 = vsub.f32 %v1004, %v1079
          %v1101 = vsub.f32 %v1005, %v1084
          %v1102 = vmul.f32 %v1086, 1.442695
          %v1103 = vpow.pop %v1102
          %v1104 = vmul.f32 %v1087, 1.442695
          %v1105 = vpow.pop %v1104
          %v1106 = vmul.f32 %v1088, 1.442695
          %v1107 = vpow.pop %v1106
          %v1108 = vmul.f32 %v1089, 1.442695
          %v1109 = vpow.pop %v1108
          %v1110 = vmul.f32 %v1090, 1.442695
          %v1111 = vpow.pop %v1110
          %v1112 = vmul.f32 %v1091, 1.442695
          %v1113 = vpow.pop %v1112
          %v1114 = vmul.f32 %v1092, 1.442695
          %v1115 = vpow.pop %v1114
          %v1116 = vmul.f32 %v1093, 1.442695
          %v1117 = vpow.pop %v1116
          %v1118 = vmul.f32 %v1094, 1.442695
          %v1119 = vpow.pop %v1118
          %v1120 = vmul.f32 %v1095, 1.442695
          %v1121 = vpow.pop %v1120
          %v1122 = vmul.f32 %v1096, 1.442695
          %v1123 = vpow.pop %v1122
          %v1124 = vmul.f32 %v1097, 1.442695
          %v1125 = vpow.pop %v1124
          %v1126 = vmul.f32 %v1098, 1.442695
          %v1127 = vpow.pop %v1126
          %v1128 = vmul.f32 %v1099, 1.442695
          %v1129 = vpow.pop %v1128
          %v1130 = vmul.f32 %v1100, 1.442695
          %v1131 = vpow.pop %v1130
          %v1132 = vmul.f32 %v1101, 1.442695
          %v1133 = vpow.pop %v1132
          %1135 = vset.pattern.permute.xlu0 0
          %1136 = vperm.xlu0 %1135, %v959
          %v1137 = vpop.permute.xlu0 %1136
          %1140 = vset.pattern.permute.xlu0 0
          %1141 = vperm.xlu0 %1140, %v961
          %v1142 = vpop.permute.xlu0 %1141
          %1145 = vset.pattern.permute.xlu0 0
          %1146 = vperm.xlu0 %1145, %v963
          %v1147 = vpop.permute.xlu0 %1146
          %1150 = vset.pattern.permute.xlu0 0
          %1151 = vperm.xlu0 %1150, %v965
          %v1152 = vpop.permute.xlu0 %1151
          %1155 = vset.pattern.permute.xlu0 0
          %1156 = vperm.xlu0 %1155, %v967
          %v1157 = vpop.permute.xlu0 %1156
          %1160 = vset.pattern.permute.xlu0 0
          %1161 = vperm.xlu0 %1160, %v969
          %v1162 = vpop.permute.xlu0 %1161
          %1165 = vset.pattern.permute.xlu0 0
          %1166 = vperm.xlu0 %1165, %v971
          %v1167 = vpop.permute.xlu0 %1166
          %1170 = vset.pattern.permute.xlu0 0
          %1171 = vperm.xlu0 %1170, %v973
          %v1172 = vpop.permute.xlu0 %1171
          %1175 = vset.pattern.permute.xlu0 0
          %1176 = vperm.xlu0 %1175, %v975
          %v1177 = vpop.permute.xlu0 %1176
          %1180 = vset.pattern.permute.xlu0 0
          %1181 = vperm.xlu0 %1180, %v977
          %v1182 = vpop.permute.xlu0 %1181
          %1185 = vset.pattern.permute.xlu0 0
          %1186 = vperm.xlu0 %1185, %v979
          %v1187 = vpop.permute.xlu0 %1186
          %1190 = vset.pattern.permute.xlu0 0
          %1191 = vperm.xlu0 %1190, %v981
          %v1192 = vpop.permute.xlu0 %1191
          %1195 = vset.pattern.permute.xlu0 0
          %1196 = vperm.xlu0 %1195, %v983
          %v1197 = vpop.permute.xlu0 %1196
          %1200 = vset.pattern.permute.xlu0 0
          %1201 = vperm.xlu0 %1200, %v985
          %v1202 = vpop.permute.xlu0 %1201
          %1205 = vset.pattern.permute.xlu0 0
          %1206 = vperm.xlu0 %1205, %v987
          %v1207 = vpop.permute.xlu0 %1206
          %1210 = vset.pattern.permute.xlu0 0
          %1211 = vperm.xlu0 %1210, %v989
          %v1212 = vpop.permute.xlu0 %1211
          %v1214 = vmul.f32 %v1103, %v1137
          %v1215 = vmul.f32 %v1105, %v1142
          %v1216 = vmul.f32 %v1107, %v1147
          %v1217 = vmul.f32 %v1109, %v1152
          %v1218 = vmul.f32 %v1111, %v1157
          %v1219 = vmul.f32 %v1113, %v1162
          %v1220 = vmul.f32 %v1115, %v1167
          %v1221 = vmul.f32 %v1117, %v1172
          %v1222 = vmul.f32 %v1119, %v1177
          %v1223 = vmul.f32 %v1121, %v1182
          %v1224 = vmul.f32 %v1123, %v1187
          %v1225 = vmul.f32 %v1125, %v1192
          %v1226 = vmul.f32 %v1127, %v1197
          %v1227 = vmul.f32 %v1129, %v1202
          %v1228 = vmul.f32 %v1131, %v1207
          %v1229 = vmul.f32 %v1133, %v1212
          %1230 = vst [vmem:[%s274] sm:$0xff] %v1214
          %1231 = vst [vmem:[%s274 + $0x8] sm:$0xff] %v1215
          %1232 = vst [vmem:[%s274 + $0x10] sm:$0xff] %v1216
          %1233 = vst [vmem:[%s274 + $0x18] sm:$0xff] %v1217
          %1234 = vst [vmem:[%s274 + $0x20] sm:$0xff] %v1218
          %1235 = vst [vmem:[%s274 + $0x28] sm:$0xff] %v1219
          %1236 = vst [vmem:[%s274 + $0x30] sm:$0xff] %v1220
          %1237 = vst [vmem:[%s274 + $0x38] sm:$0xff] %v1221
          %1238 = vst [vmem:[%s274 + $0x40] sm:$0xff] %v1222
          %1239 = vst [vmem:[%s274 + $0x48] sm:$0xff] %v1223
          %1240 = vst [vmem:[%s274 + $0x50] sm:$0xff] %v1224
          %1241 = vst [vmem:[%s274 + $0x58] sm:$0xff] %v1225
          %1242 = vst [vmem:[%s274 + $0x60] sm:$0xff] %v1226
          %1243 = vst [vmem:[%s274 + $0x68] sm:$0xff] %v1227
          %1244 = vst [vmem:[%s274 + $0x70] sm:$0xff] %v1228
          %1245 = vst [vmem:[%s274 + $0x78] sm:$0xff] %v1229
          %s1246 = scalar_lea.vmem %s274, 128
          %v1247 = vld [vmem:[%s1246] sm:$0xff]
          %v1248 = vld [vmem:[%s1246 + $0x8] sm:$0xff]
          %v1249 = vld [vmem:[%s1246 + $0x10] sm:$0xff]
          %v1250 = vld [vmem:[%s1246 + $0x18] sm:$0xff]
          %v1251 = vld [vmem:[%s1246 + $0x20] sm:$0xff]
          %v1252 = vld [vmem:[%s1246 + $0x28] sm:$0xff]
          %v1253 = vld [vmem:[%s1246 + $0x30] sm:$0xff]
          %v1254 = vld [vmem:[%s1246 + $0x38] sm:$0xff]
          %v1255 = vld [vmem:[%s1246 + $0x40] sm:$0xff]
          %v1256 = vld [vmem:[%s1246 + $0x48] sm:$0xff]
          %v1257 = vld [vmem:[%s1246 + $0x50] sm:$0xff]
          %v1258 = vld [vmem:[%s1246 + $0x58] sm:$0xff]
          %v1259 = vld [vmem:[%s1246 + $0x60] sm:$0xff]
          %v1260 = vld [vmem:[%s1246 + $0x68] sm:$0xff]
          %v1261 = vld [vmem:[%s1246 + $0x70] sm:$0xff]
          %v1262 = vld [vmem:[%s1246 + $0x78] sm:$0xff]
          %v1263 = vsub.f32 %v1247, %v1009
          %v1264 = vsub.f32 %v1248, %v1014
          %v1265 = vsub.f32 %v1249, %v1019
          %v1266 = vsub.f32 %v1250, %v1024
          %v1267 = vsub.f32 %v1251, %v1029
          %v1268 = vsub.f32 %v1252, %v1034
          %v1269 = vsub.f32 %v1253, %v1039
          %v1270 = vsub.f32 %v1254, %v1044
          %v1271 = vsub.f32 %v1255, %v1049
          %v1272 = vsub.f32 %v1256, %v1054
          %v1273 = vsub.f32 %v1257, %v1059
          %v1274 = vsub.f32 %v1258, %v1064
          %v1275 = vsub.f32 %v1259, %v1069
          %v1276 = vsub.f32 %v1260, %v1074
          %v1277 = vsub.f32 %v1261, %v1079
          %v1278 = vsub.f32 %v1262, %v1084
          %v1279 = vmul.f32 %v1263, 1.442695
          %v1280 = vpow.pop %v1279
          %v1281 = vmul.f32 %v1264, 1.442695
          %v1282 = vpow.pop %v1281
          %v1283 = vmul.f32 %v1265, 1.442695
          %v1284 = vpow.pop %v1283
          %v1285 = vmul.f32 %v1266, 1.442695
          %v1286 = vpow.pop %v1285
          %v1287 = vmul.f32 %v1267, 1.442695
          %v1288 = vpow.pop %v1287
          %v1289 = vmul.f32 %v1268, 1.442695
          %v1290 = vpow.pop %v1289
          %v1291 = vmul.f32 %v1269, 1.442695
          %v1292 = vpow.pop %v1291
          %v1293 = vmul.f32 %v1270, 1.442695
          %v1294 = vpow.pop %v1293
          %v1295 = vmul.f32 %v1271, 1.442695
          %v1296 = vpow.pop %v1295
          %v1297 = vmul.f32 %v1272, 1.442695
          %v1298 = vpow.pop %v1297
          %v1299 = vmul.f32 %v1273, 1.442695
          %v1300 = vpow.pop %v1299
          %v1301 = vmul.f32 %v1274, 1.442695
          %v1302 = vpow.pop %v1301
          %v1303 = vmul.f32 %v1275, 1.442695
          %v1304 = vpow.pop %v1303
          %v1305 = vmul.f32 %v1276, 1.442695
          %v1306 = vpow.pop %v1305
          %v1307 = vmul.f32 %v1277, 1.442695
          %v1308 = vpow.pop %v1307
          %v1309 = vmul.f32 %v1278, 1.442695
          %v1310 = vpow.pop %v1309
          %v1311 = vmul.f32 %v1280, %v1137
          %v1312 = vmul.f32 %v1282, %v1142
          %v1313 = vmul.f32 %v1284, %v1147
          %v1314 = vmul.f32 %v1286, %v1152
          %v1315 = vmul.f32 %v1288, %v1157
          %v1316 = vmul.f32 %v1290, %v1162
          %v1317 = vmul.f32 %v1292, %v1167
          %v1318 = vmul.f32 %v1294, %v1172
          %v1319 = vmul.f32 %v1296, %v1177
          %v1320 = vmul.f32 %v1298, %v1182
          %v1321 = vmul.f32 %v1300, %v1187
          %v1322 = vmul.f32 %v1302, %v1192
          %v1323 = vmul.f32 %v1304, %v1197
          %v1324 = vmul.f32 %v1306, %v1202
          %v1325 = vmul.f32 %v1308, %v1207
          %v1326 = vmul.f32 %v1310, %v1212
          %1327 = vst [vmem:[%s1246] sm:$0xff] %v1311
          %1328 = vst [vmem:[%s1246 + $0x8] sm:$0xff] %v1312
          %1329 = vst [vmem:[%s1246 + $0x10] sm:$0xff] %v1313
          %1330 = vst [vmem:[%s1246 + $0x18] sm:$0xff] %v1314
          %1331 = vst [vmem:[%s1246 + $0x20] sm:$0xff] %v1315
          %1332 = vst [vmem:[%s1246 + $0x28] sm:$0xff] %v1316
          %1333 = vst [vmem:[%s1246 + $0x30] sm:$0xff] %v1317
          %1334 = vst [vmem:[%s1246 + $0x38] sm:$0xff] %v1318
          %1335 = vst [vmem:[%s1246 + $0x40] sm:$0xff] %v1319
          %1336 = vst [vmem:[%s1246 + $0x48] sm:$0xff] %v1320
          %1337 = vst [vmem:[%s1246 + $0x50] sm:$0xff] %v1321
          %1338 = vst [vmem:[%s1246 + $0x58] sm:$0xff] %v1322
          %1339 = vst [vmem:[%s1246 + $0x60] sm:$0xff] %v1323
          %1340 = vst [vmem:[%s1246 + $0x68] sm:$0xff] %v1324
          %1341 = vst [vmem:[%s1246 + $0x70] sm:$0xff] %v1325
          %1342 = vst [vmem:[%s1246 + $0x78] sm:$0xff] %v1326
          %s1343 = scalar_lea.vmem %s274, 256
          %v1344 = vld [vmem:[%s1343] sm:$0xff]
          %v1345 = vld [vmem:[%s1343 + $0x8] sm:$0xff]
          %v1346 = vld [vmem:[%s1343 + $0x10] sm:$0xff]
          %v1347 = vld [vmem:[%s1343 + $0x18] sm:$0xff]
          %v1348 = vld [vmem:[%s1343 + $0x20] sm:$0xff]
          %v1349 = vld [vmem:[%s1343 + $0x28] sm:$0xff]
          %v1350 = vld [vmem:[%s1343 + $0x30] sm:$0xff]
          %v1351 = vld [vmem:[%s1343 + $0x38] sm:$0xff]
          %v1352 = vld [vmem:[%s1343 + $0x40] sm:$0xff]
          %v1353 = vld [vmem:[%s1343 + $0x48] sm:$0xff]
          %v1354 = vld [vmem:[%s1343 + $0x50] sm:$0xff]
          %v1355 = vld [vmem:[%s1343 + $0x58] sm:$0xff]
          %v1356 = vld [vmem:[%s1343 + $0x60] sm:$0xff]
          %v1357 = vld [vmem:[%s1343 + $0x68] sm:$0xff]
          %v1358 = vld [vmem:[%s1343 + $0x70] sm:$0xff]
          %v1359 = vld [vmem:[%s1343 + $0x78] sm:$0xff]
          %v1360 = vsub.f32 %v1344, %v1009
          %v1361 = vsub.f32 %v1345, %v1014
          %v1362 = vsub.f32 %v1346, %v1019
          %v1363 = vsub.f32 %v1347, %v1024
          %v1364 = vsub.f32 %v1348, %v1029
          %v1365 = vsub.f32 %v1349, %v1034
          %v1366 = vsub.f32 %v1350, %v1039
          %v1367 = vsub.f32 %v1351, %v1044
          %v1368 = vsub.f32 %v1352, %v1049
          %v1369 = vsub.f32 %v1353, %v1054
          %v1370 = vsub.f32 %v1354, %v1059
          %v1371 = vsub.f32 %v1355, %v1064
          %v1372 = vsub.f32 %v1356, %v1069
          %v1373 = vsub.f32 %v1357, %v1074
          %v1374 = vsub.f32 %v1358, %v1079
          %v1375 = vsub.f32 %v1359, %v1084
          %v1376 = vmul.f32 %v1360, 1.442695
          %v1377 = vpow.pop %v1376
          %v1378 = vmul.f32 %v1361, 1.442695
          %v1379 = vpow.pop %v1378
          %v1380 = vmul.f32 %v1362, 1.442695
          %v1381 = vpow.pop %v1380
          %v1382 = vmul.f32 %v1363, 1.442695
          %v1383 = vpow.pop %v1382
          %v1384 = vmul.f32 %v1364, 1.442695
          %v1385 = vpow.pop %v1384
          %v1386 = vmul.f32 %v1365, 1.442695
          %v1387 = vpow.pop %v1386
          %v1388 = vmul.f32 %v1366, 1.442695
          %v1389 = vpow.pop %v1388
          %v1390 = vmul.f32 %v1367, 1.442695
          %v1391 = vpow.pop %v1390
          %v1392 = vmul.f32 %v1368, 1.442695
          %v1393 = vpow.pop %v1392
          %v1394 = vmul.f32 %v1369, 1.442695
          %v1395 = vpow.pop %v1394
          %v1396 = vmul.f32 %v1370, 1.442695
          %v1397 = vpow.pop %v1396
          %v1398 = vmul.f32 %v1371, 1.442695
          %v1399 = vpow.pop %v1398
          %v1400 = vmul.f32 %v1372, 1.442695
          %v1401 = vpow.pop %v1400
          %v1402 = vmul.f32 %v1373, 1.442695
          %v1403 = vpow.pop %v1402
          %v1404 = vmul.f32 %v1374, 1.442695
          %v1405 = vpow.pop %v1404
          %v1406 = vmul.f32 %v1375, 1.442695
          %v1407 = vpow.pop %v1406
          %v1408 = vmul.f32 %v1377, %v1137
          %v1409 = vmul.f32 %v1379, %v1142
          %v1410 = vmul.f32 %v1381, %v1147
          %v1411 = vmul.f32 %v1383, %v1152
          %v1412 = vmul.f32 %v1385, %v1157
          %v1413 = vmul.f32 %v1387, %v1162
          %v1414 = vmul.f32 %v1389, %v1167
          %v1415 = vmul.f32 %v1391, %v1172
          %v1416 = vmul.f32 %v1393, %v1177
          %v1417 = vmul.f32 %v1395, %v1182
          %v1418 = vmul.f32 %v1397, %v1187
          %v1419 = vmul.f32 %v1399, %v1192
          %v1420 = vmul.f32 %v1401, %v1197
          %v1421 = vmul.f32 %v1403, %v1202
          %v1422 = vmul.f32 %v1405, %v1207
          %v1423 = vmul.f32 %v1407, %v1212
          %1424 = vst [vmem:[%s1343] sm:$0xff] %v1408
          %1425 = vst [vmem:[%s1343 + $0x8] sm:$0xff] %v1409
          %1426 = vst [vmem:[%s1343 + $0x10] sm:$0xff] %v1410
          %1427 = vst [vmem:[%s1343 + $0x18] sm:$0xff] %v1411
          %1428 = vst [vmem:[%s1343 + $0x20] sm:$0xff] %v1412
          %1429 = vst [vmem:[%s1343 + $0x28] sm:$0xff] %v1413
          %1430 = vst [vmem:[%s1343 + $0x30] sm:$0xff] %v1414
          %1431 = vst [vmem:[%s1343 + $0x38] sm:$0xff] %v1415
          %1432 = vst [vmem:[%s1343 + $0x40] sm:$0xff] %v1416
          %1433 = vst [vmem:[%s1343 + $0x48] sm:$0xff] %v1417
          %1434 = vst [vmem:[%s1343 + $0x50] sm:$0xff] %v1418
          %1435 = vst [vmem:[%s1343 + $0x58] sm:$0xff] %v1419
          %1436 = vst [vmem:[%s1343 + $0x60] sm:$0xff] %v1420
          %1437 = vst [vmem:[%s1343 + $0x68] sm:$0xff] %v1421
          %1438 = vst [vmem:[%s1343 + $0x70] sm:$0xff] %v1422
          %1439 = vst [vmem:[%s1343 + $0x78] sm:$0xff] %v1423
          %s1440 = scalar_lea.vmem %s274, 384
          %v1441 = vld [vmem:[%s1440] sm:$0xff]
          %v1442 = vld [vmem:[%s1440 + $0x8] sm:$0xff]
          %v1443 = vld [vmem:[%s1440 + $0x10] sm:$0xff]
          %v1444 = vld [vmem:[%s1440 + $0x18] sm:$0xff]
          %v1445 = vld [vmem:[%s1440 + $0x20] sm:$0xff]
          %v1446 = vld [vmem:[%s1440 + $0x28] sm:$0xff]
          %v1447 = vld [vmem:[%s1440 + $0x30] sm:$0xff]
          %v1448 = vld [vmem:[%s1440 + $0x38] sm:$0xff]
          %v1449 = vld [vmem:[%s1440 + $0x40] sm:$0xff]
          %v1450 = vld [vmem:[%s1440 + $0x48] sm:$0xff]
          %v1451 = vld [vmem:[%s1440 + $0x50] sm:$0xff]
          %v1452 = vld [vmem:[%s1440 + $0x58] sm:$0xff]
          %v1453 = vld [vmem:[%s1440 + $0x60] sm:$0xff]
          %v1454 = vld [vmem:[%s1440 + $0x68] sm:$0xff]
          %v1455 = vld [vmem:[%s1440 + $0x70] sm:$0xff]
          %v1456 = vld [vmem:[%s1440 + $0x78] sm:$0xff]
          %v1457 = vsub.f32 %v1441, %v1009
          %v1458 = vsub.f32 %v1442, %v1014
          %v1459 = vsub.f32 %v1443, %v1019
          %v1460 = vsub.f32 %v1444, %v1024
          %v1461 = vsub.f32 %v1445, %v1029
          %v1462 = vsub.f32 %v1446, %v1034
          %v1463 = vsub.f32 %v1447, %v1039
          %v1464 = vsub.f32 %v1448, %v1044
          %v1465 = vsub.f32 %v1449, %v1049
          %v1466 = vsub.f32 %v1450, %v1054
          %v1467 = vsub.f32 %v1451, %v1059
          %v1468 = vsub.f32 %v1452, %v1064
          %v1469 = vsub.f32 %v1453, %v1069
          %v1470 = vsub.f32 %v1454, %v1074
          %v1471 = vsub.f32 %v1455, %v1079
          %v1472 = vsub.f32 %v1456, %v1084
          %v1473 = vmul.f32 %v1457, 1.442695
          %v1474 = vpow.pop %v1473
          %v1475 = vmul.f32 %v1458, 1.442695
          %v1476 = vpow.pop %v1475
          %v1477 = vmul.f32 %v1459, 1.442695
          %v1478 = vpow.pop %v1477
          %v1479 = vmul.f32 %v1460, 1.442695
          %v1480 = vpow.pop %v1479
          %v1481 = vmul.f32 %v1461, 1.442695
          %v1482 = vpow.pop %v1481
          %v1483 = vmul.f32 %v1462, 1.442695
          %v1484 = vpow.pop %v1483
          %v1485 = vmul.f32 %v1463, 1.442695
          %v1486 = vpow.pop %v1485
          %v1487 = vmul.f32 %v1464, 1.442695
          %v1488 = vpow.pop %v1487
          %v1489 = vmul.f32 %v1465, 1.442695
          %v1490 = vpow.pop %v1489
          %v1491 = vmul.f32 %v1466, 1.442695
          %v1492 = vpow.pop %v1491
          %v1493 = vmul.f32 %v1467, 1.442695
          %v1494 = vpow.pop %v1493
          %v1495 = vmul.f32 %v1468, 1.442695
          %v1496 = vpow.pop %v1495
          %v1497 = vmul.f32 %v1469, 1.442695
          %v1498 = vpow.pop %v1497
          %v1499 = vmul.f32 %v1470, 1.442695
          %v1500 = vpow.pop %v1499
          %v1501 = vmul.f32 %v1471, 1.442695
          %v1502 = vpow.pop %v1501
          %v1503 = vmul.f32 %v1472, 1.442695
          %v1504 = vpow.pop %v1503
          %v1505 = vmul.f32 %v1474, %v1137
          %v1506 = vmul.f32 %v1476, %v1142
          %v1507 = vmul.f32 %v1478, %v1147
          %v1508 = vmul.f32 %v1480, %v1152
          %v1509 = vmul.f32 %v1482, %v1157
          %v1510 = vmul.f32 %v1484, %v1162
          %v1511 = vmul.f32 %v1486, %v1167
          %v1512 = vmul.f32 %v1488, %v1172
          %v1513 = vmul.f32 %v1490, %v1177
          %v1514 = vmul.f32 %v1492, %v1182
          %v1515 = vmul.f32 %v1494, %v1187
          %v1516 = vmul.f32 %v1496, %v1192
          %v1517 = vmul.f32 %v1498, %v1197
          %v1518 = vmul.f32 %v1500, %v1202
          %v1519 = vmul.f32 %v1502, %v1207
          %v1520 = vmul.f32 %v1504, %v1212
          %1521 = vst [vmem:[%s1440] sm:$0xff] %v1505
          %1522 = vst [vmem:[%s1440 + $0x8] sm:$0xff] %v1506
          %1523 = vst [vmem:[%s1440 + $0x10] sm:$0xff] %v1507
          %1524 = vst [vmem:[%s1440 + $0x18] sm:$0xff] %v1508
          %1525 = vst [vmem:[%s1440 + $0x20] sm:$0xff] %v1509
          %1526 = vst [vmem:[%s1440 + $0x28] sm:$0xff] %v1510
          %1527 = vst [vmem:[%s1440 + $0x30] sm:$0xff] %v1511
          %1528 = vst [vmem:[%s1440 + $0x38] sm:$0xff] %v1512
          %1529 = vst [vmem:[%s1440 + $0x40] sm:$0xff] %v1513
          %1530 = vst [vmem:[%s1440 + $0x48] sm:$0xff] %v1514
          %1531 = vst [vmem:[%s1440 + $0x50] sm:$0xff] %v1515
          %1532 = vst [vmem:[%s1440 + $0x58] sm:$0xff] %v1516
          %1533 = vst [vmem:[%s1440 + $0x60] sm:$0xff] %v1517
          %1534 = vst [vmem:[%s1440 + $0x68] sm:$0xff] %v1518
          %1535 = vst [vmem:[%s1440 + $0x70] sm:$0xff] %v1519
          %1536 = vst [vmem:[%s1440 + $0x78] sm:$0xff] %v1520
        $region88: #{forward_impl.1} parent=68 // pred_fallthru
          _
        %s1537 = smul.u32 4, %s25
        %p1538 = scmp.lt.s32.totalorder %s1537, 3
        %s1539 = scalar_select %p1538, %s1537, 3
        %s1540 = smul.addr %s1539, 16
        %s1541 = smul.addr %s1540, 8
        %s1542 = scalar_lea.vmem %s4, %s1541
        // Predicated region
        $region89: #{forward_impl.1} parent=68 // pred_check
          %p1543 = pneg %p124
        $region90: #{forward_impl.1} parent=68 // pred_check_branch
          %1545 = sbr.rel (%p1543) target = $region92
        $region91: #{forward_impl.1} parent=68 // pred_region
          %s1546 = smul.u32 4, %s25
        $region92: #{forward_impl.1} parent=68 // pred_fallthru
          _
        // Predicated region
        $region93: #{forward_impl.1} parent=68 // pred_check
          %p1547 = pneg %p124
        $region94: #{forward_impl.1} parent=68 // pred_check_branch
          %1549 = sbr.rel (%p1547) target = $region96
        $region95: #{forward_impl.1} parent=68 // pred_region
          %s1550 = smul.u32 4, %s25
          %p1551 = scmp.lt.s32.totalorder %s1550, 3
          %s1552 = scalar_select %p1551, %s1550, 3
          %s1553 = smul.addr %s1552, 16
          %s1554 = smul.addr %s1553, 8
          %s1555 = scalar_lea.vmem %s4, %s1554
        $region96: #{forward_impl.1} parent=68 // pred_fallthru
          _
      $region69: #{forward_impl.1} parent=5 // pred_fallthru
        _
      %p1556 = scmp.le.s32.totalorder 2, %s16
      // Predicated region
      $region97: #{forward_impl.1} parent=5 // pred_check
        %p1557 = pneg %p1556
      $region98: #{forward_impl.1} parent=5 // pred_check_branch
        %1559 = sbr.rel (%p1557) target = $region100
      $region99: #{forward_impl.1} parent=5 // pred_region
        %s1560 = ssub.s32 %s16, 2
      $region100: #{forward_impl.1} parent=5 // pred_fallthru
        _
    $region6: #{forward_impl.1} parent=1 // loop_footer
      %s20 = sadd.s32 1, %s16
    $region7: #{forward_impl.1} parent=1 // loop_footer_branch
      %15 = sbr.rel target = $region3
    $region8: #{forward_impl.1} parent=1 // loop_exit
      _

</llo_original>
